<compile_context>
chip_gen: v5e
topology: v5e:2x2
jax: 0.10.0
libtpu: 0.0.40
codegen_flags: <defaults>
</compile_context>

<pallas_src>
import functools

import jax
import jax.numpy as jnp
from jax.experimental import pallas as pl
from jax.experimental.pallas import tpu as pltpu

DEFAULT_TOKEN_BLOCK = 256   # tokens per output tile (rows of the flattened (B*S, H) activation)
DMA_WINDOW = 8              # word-row gather DMAs kept in flight


# ------------------------------- Pallas kernel ------------------------------ #

def _embeddings_kernel(wid_ref, pid_ref,            # SMEM scalar-prefetch: word ids, position ids
                       w_hbm_ref,                   # (vocab, H) word table, left in HBM
                       pos_tab_ref, tt_tab_ref,     # VMEM-resident position / token_type tables
                       tt_ids_ref,                  # (tm, 1) int32 token_type ids
                       gamma_ref, beta_ref,         # (1, H) LayerNorm params
                       o_ref,                       # (tm, H) output tile
                       w_buf, p_buf, sem,           # scratch: word rows, pos rows, DMA sems
                       *, eps, tokens, window):
    base = pl.program_id(0) * tokens

    def issue(t):
        wid = wid_ref[base + t]
        pltpu.make_async_copy(
            w_hbm_ref.at[pl.ds(wid, 1), :],
            w_buf.at[pl.ds(t, 1), :],
            sem.at[t % window],
        ).start()

    # Prime the gather window (wrapper guarantees tokens >= window).
    for t0 in range(window):
        issue(t0)

    def body(t, carry):
        # On-chip position-row copy (overlaps with the in-flight word-row DMAs).
        pid = pid_ref[base + t]
        p_buf[pl.ds(t, 1), :] = pos_tab_ref[pl.ds(pid, 1), :]

        # Wait for word row t, then keep the DMA window full.
        pltpu.make_async_copy(
            w_hbm_ref.at[pl.ds(0, 1), :],
            w_buf.at[pl.ds(t, 1), :],
            sem.at[t % window],
        ).wait()

        @pl.when(t + window < tokens)
        def _():
            issue(t + window)

        return carry

    jax.lax.fori_loop(0, tokens, body, 0)

    # Fused add + token_type select + single-pass LayerNorm on the whole (tm, H) tile.
    y = w_buf[...].astype(jnp.float32) + p_buf[...].astype(jnp.float32)

    tt_ids = tt_ids_ref[...]                         # (tokens, 1) int32
    tt_tab = tt_tab_ref[...].astype(jnp.float32)     # (type_vocab, H)
    tt = jnp.zeros_like(y)
    for k in range(tt_tab_ref.shape[0]):             # small static loop (2 for BERT)
        tt = jnp.where(tt_ids == k, tt_tab[k:k + 1, :], tt)
    y = y + tt

    h = y.shape[-1]
    s1 = jnp.sum(y, axis=-1, keepdims=True)
    s2 = jnp.sum(y * y, axis=-1, keepdims=True)
    mu = s1 * (1.0 / h)
    var = s2 * (1.0 / h) - mu * mu
    yn = (y - mu) * jax.lax.rsqrt(var + eps)
    o_ref[...] = (yn * gamma_ref[...].astype(jnp.float32)
                  + beta_ref[...].astype(jnp.float32)).astype(o_ref.dtype)


# --------------------------------- wrapper ---------------------------------- #

def bert_embeddings(params, input_ids, token_type_ids=None, position_ids=None,
                    *, eps=1e-12, token_block=DEFAULT_TOKEN_BLOCK):
    """Forward pass of BertEmbeddings (eval mode: dropout is identity)."""
    # TODO(synk): inputs_embeds= path (bypassing the word-embedding gather) not implemented.
    word_emb = params["word_embeddings"]        # (vocab, H)            stays in HBM (gathered)
    pos_emb = params["position_embeddings"]     # (max_position, H)     VMEM resident
    tt_emb = params["token_type_embeddings"]    # (type_vocab, H)       VMEM resident
    gamma = params["ln_gamma"].reshape(1, -1)   # (1, H)
    beta = params["ln_beta"].reshape(1, -1)     # (1, H)

    B, S = input_ids.shape
    H = word_emb.shape[1]
    MAX_POS = pos_emb.shape[0]
    TV = tt_emb.shape[0]

    if position_ids is None:
        position_ids = jnp.broadcast_to(jnp.arange(S, dtype=jnp.int32)[None, :], (B, S))
    if token_type_ids is None:
        token_type_ids = jnp.zeros((B, S), dtype=jnp.int32)

    M = B * S
    tm = token_block if M >= token_block else max(8, ((M + 7) // 8) * 8)
    m_pad = ((M + tm - 1) // tm) * tm
    pad = m_pad - M

    def flat_pad(x):
        x = x.reshape(-1).astype(jnp.int32)
        return jnp.pad(x, (0, pad)) if pad else x

    ids_flat = flat_pad(input_ids)                      # padded rows use id 0, sliced off later
    pos_flat = flat_pad(position_ids)
    tts_col = flat_pad(token_type_ids).reshape(m_pad, 1)

    window = min(DMA_WINDOW, tm)

    kernel = functools.partial(_embeddings_kernel, eps=eps, tokens=tm, window=window)

    out = pl.pallas_call(
        kernel,
        out_shape=jax.ShapeDtypeStruct((m_pad, H), word_emb.dtype),
        grid_spec=pltpu.PrefetchScalarGridSpec(
            num_scalar_prefetch=2,                       # word ids + position ids (SMEM)
            grid=(m_pad // tm,),
            in_specs=[
                pl.BlockSpec(memory_space=pl.ANY),                       # word table (HBM)
                pl.BlockSpec((MAX_POS, H), lambda i, ids, pos: (0, 0)),  # pos table, VMEM resident
                pl.BlockSpec((TV, H), lambda i, ids, pos: (0, 0)),       # token_type table, VMEM resident
                pl.BlockSpec((tm, 1), lambda i, ids, pos: (i, 0)),       # token_type ids
                pl.BlockSpec((1, H), lambda i, ids, pos: (0, 0)),        # gamma
                pl.BlockSpec((1, H), lambda i, ids, pos: (0, 0)),        # beta
            ],
            out_specs=pl.BlockSpec((tm, H), lambda i, ids, pos: (i, 0)),
            scratch_shapes=[
                pltpu.VMEM((tm, H), word_emb.dtype),     # landing buffer for word-row DMAs
                pltpu.VMEM((tm, H), pos_emb.dtype),      # gathered position rows
                pltpu.SemaphoreType.DMA((window,)),      # per-slot gather semaphores
            ],
        ),
        compiler_params=pltpu.CompilerParams(
            dimension_semantics=("parallel",),
            vmem_limit_bytes=64 * 1024 * 1024,
        ),
    )(ids_flat, pos_flat, word_emb, pos_emb, tt_emb, tts_col, gamma, beta)

    out = out[:M]
    # nn.Dropout(hidden_dropout_prob) is identity in eval mode.
    return out.reshape(B, S, H)


# ------------------------------ plain-JAX reference -------------------------- #

def bert_embeddings_reference(params, input_ids, token_type_ids, position_ids, eps=1e-12):
    e = (params["word_embeddings"][input_ids]
         + params["position_embeddings"][position_ids]
         + params["token_type_embeddings"][token_type_ids])
    mu = jnp.mean(e, axis=-1, keepdims=True)
    var = jnp.mean(jnp.square(e - mu), axis=-1, keepdims=True)
    yn = (e - mu) * jax.lax.rsqrt(var + eps)
    return yn * params["ln_gamma"].reshape(-1) + params["ln_beta"].reshape(-1)


# ----------------------------------- main ------------------------------------ #

if __name__ == "__main__":
    B, S, H = 4, 128, 128
    VOCAB, MAX_POS, TYPE_VOCAB = 1000, 512, 2
    EPS = 1e-12

    key = jax.random.PRNGKey(0)
    k_w, k_p, k_t, k_ids, k_tt, k_ids2 = jax.random.split(key, 6)

    word_table = jax.random.normal(k_w, (VOCAB, H), jnp.float32) * 0.02
    word_table = word_table.at[0].set(0.0)   # padding_idx=0
    params = {
        "word_embeddings": word_table,
        "position_embeddings": jax.random.normal(k_p, (MAX_POS, H), jnp.float32) * 0.02,
        "token_type_embeddings": jax.random.normal(k_t, (TYPE_VOCAB, H), jnp.float32) * 0.02,
        "ln_gamma": jnp.ones((1, H), jnp.float32),
        "ln_beta": jnp.zeros((1, H), jnp.float32),
    }

    # --- main check: explicit position / token_type ids, 2 token blocks --------------
    input_ids = jax.random.randint(k_ids, (B, S), 1, VOCAB, dtype=jnp.int32)
    position_ids = jnp.broadcast_to(jnp.arange(S, dtype=jnp.int32)[None, :], (B, S))
    token_type_ids = jax.random.randint(k_tt, (B, S), 0, TYPE_VOCAB, dtype=jnp.int32)

    out = bert_embeddings(params, input_ids, token_type_ids=token_type_ids,
                          position_ids=position_ids, eps=EPS)
    out = jax.block_until_ready(out)
    ref = bert_embeddings_reference(params, input_ids, token_type_ids, position_ids, eps=EPS)

    assert out.shape == (B, S, H)
    assert bool(jnp.all(jnp.isfinite(out)))
    assert bool(jnp.allclose(out, ref, atol=1e-4, rtol=1e-4)), "mismatch vs reference"

    # --- secondary check: default (None) token_type/position ids, small odd block ----
    B2, S2 = 2, 40
    input_ids2 = jax.random.randint(k_ids2, (B2, S2), 1, VOCAB, dtype=jnp.int32)
    out2 = jax.block_until_ready(bert_embeddings(params, input_ids2, eps=EPS))
    pos2 = jnp.broadcast_to(jnp.arange(S2, dtype=jnp.int32)[None, :], (B2, S2))
    tt2 = jnp.zeros((B2, S2), dtype=jnp.int32)
    ref2 = bert_embeddings_reference(params, input_ids2, tt2, pos2, eps=EPS)

    assert out2.shape == (B2, S2, H)
    assert bool(jnp.all(jnp.isfinite(out2)))
    assert bool(jnp.allclose(out2, ref2, atol=1e-4, rtol=1e-4)), "mismatch vs reference (defaults)"

    print("KERNEL_OK")
</pallas_src>

<mosaic_0001>
module attributes {stable_mosaic.version = 11 : i64} {
  func.func @_embeddings_kernel(%arg0: i32, %arg1: memref<512xi32, #tpu.memory_space<smem>>, %arg2: memref<512xi32, #tpu.memory_space<smem>>, %arg3: memref<1000x128xf32, #tpu.memory_space<any>>, %arg4: memref<512x128xf32, #tpu.memory_space<vmem>>, %arg5: memref<2x128xf32, #tpu.memory_space<vmem>>, %arg6: memref<256x1xi32, #tpu.memory_space<vmem>>, %arg7: memref<1x128xf32, #tpu.memory_space<vmem>>, %arg8: memref<1x128xf32, #tpu.memory_space<vmem>>, %arg9: memref<256x128xf32, #tpu.memory_space<vmem>>, %arg10: memref<256x128xf32, #tpu.memory_space<vmem>>, %arg11: memref<256x128xf32, #tpu.memory_space<vmem>>, %arg12: memref<8x!tpu.dma_semaphore, #tpu.memory_space<semaphore_mem>>) attributes {dimension_semantics = [#tpu.dimension_semantics<parallel>], iteration_bounds = array<i64: 2>, scalar_prefetch = 2 : i64, scratch_operands = 3 : i64, tpu.core_type = #tpu.core_type<tc>, window_params = [{}, {pipeline_mode = #tpu.pipeline_mode<synchronous>, transform_indices = @transform_1, window_bounds = array<i64: 512, 128>}, {pipeline_mode = #tpu.pipeline_mode<synchronous>, transform_indices = @transform_2, window_bounds = array<i64: 2, 128>}, {transform_indices = @transform_3, window_bounds = array<i64: 256, 1>}, {pipeline_mode = #tpu.pipeline_mode<synchronous>, transform_indices = @transform_4, window_bounds = array<i64: 1, 128>}, {pipeline_mode = #tpu.pipeline_mode<synchronous>, transform_indices = @transform_5, window_bounds = array<i64: 1, 128>}, {transform_indices = @transform_6, window_bounds = array<i64: 256, 128>}]} {
    %c256_i32 = arith.constant 256 : i32
    %0 = arith.muli %arg0, %c256_i32 : i32
    %c0_i32 = arith.constant 0 : i32
    %1 = arith.addi %0, %c0_i32 : i32
    %2 = arith.index_cast %1 : i32 to index
    %3 = memref.load %arg1[%2] : memref<512xi32, #tpu.memory_space<smem>>
    %c0_i32_0 = arith.constant 0 : i32
    %c0_i32_1 = arith.constant 0 : i32
    %4 = tpu.memref_slice %arg3[%3, %c0_i32_1] : memref<1000x128xf32, #tpu.memory_space<any>> -> memref<1x128xf32, #tpu.memory_space<any>>
    %c0_i32_2 = arith.constant 0 : i32
    %c0_i32_3 = arith.constant 0 : i32
    %5 = tpu.memref_slice %arg10[%c0_i32_2, %c0_i32_3] : memref<256x128xf32, #tpu.memory_space<vmem>> -> memref<1x128xf32, #tpu.memory_space<vmem>>
    %6 = tpu.memref_slice %arg12[%c0_i32_0] : memref<8x!tpu.dma_semaphore, #tpu.memory_space<semaphore_mem>> -> memref<1x!tpu.dma_semaphore, #tpu.memory_space<semaphore_mem>>
    %7 = tpu.memref_squeeze %6 : memref<1x!tpu.dma_semaphore, #tpu.memory_space<semaphore_mem>> -> memref<!tpu.dma_semaphore, #tpu.memory_space<semaphore_mem>>
    tpu.enqueue_dma source(%4 : memref<1x128xf32, #tpu.memory_space<any>>) target(%5 : memref<1x128xf32, #tpu.memory_space<vmem>>) target_semaphore(%7 : memref<!tpu.dma_semaphore, #tpu.memory_space<semaphore_mem>>)
    %c1_i32 = arith.constant 1 : i32
    %8 = arith.addi %0, %c1_i32 : i32
    %9 = arith.index_cast %8 : i32 to index
    %10 = memref.load %arg1[%9] : memref<512xi32, #tpu.memory_space<smem>>
    %c1_i32_4 = arith.constant 1 : i32
    %c0_i32_5 = arith.constant 0 : i32
    %11 = tpu.memref_slice %arg3[%10, %c0_i32_5] : memref<1000x128xf32, #tpu.memory_space<any>> -> memref<1x128xf32, #tpu.memory_space<any>>
    %c1_i32_6 = arith.constant 1 : i32
    %c0_i32_7 = arith.constant 0 : i32
    %12 = tpu.memref_slice %arg10[%c1_i32_6, %c0_i32_7] : memref<256x128xf32, #tpu.memory_space<vmem>> -> memref<1x128xf32, #tpu.memory_space<vmem>>
    %13 = tpu.memref_slice %arg12[%c1_i32_4] : memref<8x!tpu.dma_semaphore, #tpu.memory_space<semaphore_mem>> -> memref<1x!tpu.dma_semaphore, #tpu.memory_space<semaphore_mem>>
    %14 = tpu.memref_squeeze %13 : memref<1x!tpu.dma_semaphore, #tpu.memory_space<semaphore_mem>> -> memref<!tpu.dma_semaphore, #tpu.memory_space<semaphore_mem>>
    tpu.enqueue_dma source(%11 : memref<1x128xf32, #tpu.memory_space<any>>) target(%12 : memref<1x128xf32, #tpu.memory_space<vmem>>) target_semaphore(%14 : memref<!tpu.dma_semaphore, #tpu.memory_space<semaphore_mem>>)
    %c2_i32 = arith.constant 2 : i32
    %15 = arith.addi %0, %c2_i32 : i32
    %16 = arith.index_cast %15 : i32 to index
    %17 = memref.load %arg1[%16] : memref<512xi32, #tpu.memory_space<smem>>
    %c2_i32_8 = arith.constant 2 : i32
    %c0_i32_9 = arith.constant 0 : i32
    %18 = tpu.memref_slice %arg3[%17, %c0_i32_9] : memref<1000x128xf32, #tpu.memory_space<any>> -> memref<1x128xf32, #tpu.memory_space<any>>
    %c2_i32_10 = arith.constant 2 : i32
    %c0_i32_11 = arith.constant 0 : i32
    %19 = tpu.memref_slice %arg10[%c2_i32_10, %c0_i32_11] : memref<256x128xf32, #tpu.memory_space<vmem>> -> memref<1x128xf32, #tpu.memory_space<vmem>>
    %20 = tpu.memref_slice %arg12[%c2_i32_8] : memref<8x!tpu.dma_semaphore, #tpu.memory_space<semaphore_mem>> -> memref<1x!tpu.dma_semaphore, #tpu.memory_space<semaphore_mem>>
    %21 = tpu.memref_squeeze %20 : memref<1x!tpu.dma_semaphore, #tpu.memory_space<semaphore_mem>> -> memref<!tpu.dma_semaphore, #tpu.memory_space<semaphore_mem>>
    tpu.enqueue_dma source(%18 : memref<1x128xf32, #tpu.memory_space<any>>) target(%19 : memref<1x128xf32, #tpu.memory_space<vmem>>) target_semaphore(%21 : memref<!tpu.dma_semaphore, #tpu.memory_space<semaphore_mem>>)
    %c3_i32 = arith.constant 3 : i32
    %22 = arith.addi %0, %c3_i32 : i32
    %23 = arith.index_cast %22 : i32 to index
    %24 = memref.load %arg1[%23] : memref<512xi32, #tpu.memory_space<smem>>
    %c3_i32_12 = arith.constant 3 : i32
    %c0_i32_13 = arith.constant 0 : i32
    %25 = tpu.memref_slice %arg3[%24, %c0_i32_13] : memref<1000x128xf32, #tpu.memory_space<any>> -> memref<1x128xf32, #tpu.memory_space<any>>
    %c3_i32_14 = arith.constant 3 : i32
    %c0_i32_15 = arith.constant 0 : i32
    %26 = tpu.memref_slice %arg10[%c3_i32_14, %c0_i32_15] : memref<256x128xf32, #tpu.memory_space<vmem>> -> memref<1x128xf32, #tpu.memory_space<vmem>>
    %27 = tpu.memref_slice %arg12[%c3_i32_12] : memref<8x!tpu.dma_semaphore, #tpu.memory_space<semaphore_mem>> -> memref<1x!tpu.dma_semaphore, #tpu.memory_space<semaphore_mem>>
    %28 = tpu.memref_squeeze %27 : memref<1x!tpu.dma_semaphore, #tpu.memory_space<semaphore_mem>> -> memref<!tpu.dma_semaphore, #tpu.memory_space<semaphore_mem>>
    tpu.enqueue_dma source(%25 : memref<1x128xf32, #tpu.memory_space<any>>) target(%26 : memref<1x128xf32, #tpu.memory_space<vmem>>) target_semaphore(%28 : memref<!tpu.dma_semaphore, #tpu.memory_space<semaphore_mem>>)
    %c4_i32 = arith.constant 4 : i32
    %29 = arith.addi %0, %c4_i32 : i32
    %30 = arith.index_cast %29 : i32 to index
    %31 = memref.load %arg1[%30] : memref<512xi32, #tpu.memory_space<smem>>
    %c4_i32_16 = arith.constant 4 : i32
    %c0_i32_17 = arith.constant 0 : i32
    %32 = tpu.memref_slice %arg3[%31, %c0_i32_17] : memref<1000x128xf32, #tpu.memory_space<any>> -> memref<1x128xf32, #tpu.memory_space<any>>
    %c4_i32_18 = arith.constant 4 : i32
    %c0_i32_19 = arith.constant 0 : i32
    %33 = tpu.memref_slice %arg10[%c4_i32_18, %c0_i32_19] : memref<256x128xf32, #tpu.memory_space<vmem>> -> memref<1x128xf32, #tpu.memory_space<vmem>>
    %34 = tpu.memref_slice %arg12[%c4_i32_16] : memref<8x!tpu.dma_semaphore, #tpu.memory_space<semaphore_mem>> -> memref<1x!tpu.dma_semaphore, #tpu.memory_space<semaphore_mem>>
    %35 = tpu.memref_squeeze %34 : memref<1x!tpu.dma_semaphore, #tpu.memory_space<semaphore_mem>> -> memref<!tpu.dma_semaphore, #tpu.memory_space<semaphore_mem>>
    tpu.enqueue_dma source(%32 : memref<1x128xf32, #tpu.memory_space<any>>) target(%33 : memref<1x128xf32, #tpu.memory_space<vmem>>) target_semaphore(%35 : memref<!tpu.dma_semaphore, #tpu.memory_space<semaphore_mem>>)
    %c5_i32 = arith.constant 5 : i32
    %36 = arith.addi %0, %c5_i32 : i32
    %37 = arith.index_cast %36 : i32 to index
    %38 = memref.load %arg1[%37] : memref<512xi32, #tpu.memory_space<smem>>
    %c5_i32_20 = arith.constant 5 : i32
    %c0_i32_21 = arith.constant 0 : i32
    %39 = tpu.memref_slice %arg3[%38, %c0_i32_21] : memref<1000x128xf32, #tpu.memory_space<any>> -> memref<1x128xf32, #tpu.memory_space<any>>
    %c5_i32_22 = arith.constant 5 : i32
    %c0_i32_23 = arith.constant 0 : i32
    %40 = tpu.memref_slice %arg10[%c5_i32_22, %c0_i32_23] : memref<256x128xf32, #tpu.memory_space<vmem>> -> memref<1x128xf32, #tpu.memory_space<vmem>>
    %41 = tpu.memref_slice %arg12[%c5_i32_20] : memref<8x!tpu.dma_semaphore, #tpu.memory_space<semaphore_mem>> -> memref<1x!tpu.dma_semaphore, #tpu.memory_space<semaphore_mem>>
    %42 = tpu.memref_squeeze %41 : memref<1x!tpu.dma_semaphore, #tpu.memory_space<semaphore_mem>> -> memref<!tpu.dma_semaphore, #tpu.memory_space<semaphore_mem>>
    tpu.enqueue_dma source(%39 : memref<1x128xf32, #tpu.memory_space<any>>) target(%40 : memref<1x128xf32, #tpu.memory_space<vmem>>) target_semaphore(%42 : memref<!tpu.dma_semaphore, #tpu.memory_space<semaphore_mem>>)
    %c6_i32 = arith.constant 6 : i32
    %43 = arith.addi %0, %c6_i32 : i32
    %44 = arith.index_cast %43 : i32 to index
    %45 = memref.load %arg1[%44] : memref<512xi32, #tpu.memory_space<smem>>
    %c6_i32_24 = arith.constant 6 : i32
    %c0_i32_25 = arith.constant 0 : i32
    %46 = tpu.memref_slice %arg3[%45, %c0_i32_25] : memref<1000x128xf32, #tpu.memory_space<any>> -> memref<1x128xf32, #tpu.memory_space<any>>
    %c6_i32_26 = arith.constant 6 : i32
    %c0_i32_27 = arith.constant 0 : i32
    %47 = tpu.memref_slice %arg10[%c6_i32_26, %c0_i32_27] : memref<256x128xf32, #tpu.memory_space<vmem>> -> memref<1x128xf32, #tpu.memory_space<vmem>>
    %48 = tpu.memref_slice %arg12[%c6_i32_24] : memref<8x!tpu.dma_semaphore, #tpu.memory_space<semaphore_mem>> -> memref<1x!tpu.dma_semaphore, #tpu.memory_space<semaphore_mem>>
    %49 = tpu.memref_squeeze %48 : memref<1x!tpu.dma_semaphore, #tpu.memory_space<semaphore_mem>> -> memref<!tpu.dma_semaphore, #tpu.memory_space<semaphore_mem>>
    tpu.enqueue_dma source(%46 : memref<1x128xf32, #tpu.memory_space<any>>) target(%47 : memref<1x128xf32, #tpu.memory_space<vmem>>) target_semaphore(%49 : memref<!tpu.dma_semaphore, #tpu.memory_space<semaphore_mem>>)
    %c7_i32 = arith.constant 7 : i32
    %50 = arith.addi %0, %c7_i32 : i32
    %51 = arith.index_cast %50 : i32 to index
    %52 = memref.load %arg1[%51] : memref<512xi32, #tpu.memory_space<smem>>
    %c7_i32_28 = arith.constant 7 : i32
    %c0_i32_29 = arith.constant 0 : i32
    %53 = tpu.memref_slice %arg3[%52, %c0_i32_29] : memref<1000x128xf32, #tpu.memory_space<any>> -> memref<1x128xf32, #tpu.memory_space<any>>
    %c7_i32_30 = arith.constant 7 : i32
    %c0_i32_31 = arith.constant 0 : i32
    %54 = tpu.memref_slice %arg10[%c7_i32_30, %c0_i32_31] : memref<256x128xf32, #tpu.memory_space<vmem>> -> memref<1x128xf32, #tpu.memory_space<vmem>>
    %55 = tpu.memref_slice %arg12[%c7_i32_28] : memref<8x!tpu.dma_semaphore, #tpu.memory_space<semaphore_mem>> -> memref<1x!tpu.dma_semaphore, #tpu.memory_space<semaphore_mem>>
    %56 = tpu.memref_squeeze %55 : memref<1x!tpu.dma_semaphore, #tpu.memory_space<semaphore_mem>> -> memref<!tpu.dma_semaphore, #tpu.memory_space<semaphore_mem>>
    tpu.enqueue_dma source(%53 : memref<1x128xf32, #tpu.memory_space<any>>) target(%54 : memref<1x128xf32, #tpu.memory_space<vmem>>) target_semaphore(%56 : memref<!tpu.dma_semaphore, #tpu.memory_space<semaphore_mem>>)
    %c0_i32_32 = arith.constant 0 : i32
    %c256_i32_33 = arith.constant 256 : i32
    %57 = arith.addi %c0_i32_32, %c256_i32_33 : i32
    %c1_i32_34 = arith.constant 1 : i32
    scf.for %arg13 = %c0_i32_32 to %57 step %c1_i32_34  : i32 {
      %106 = arith.addi %0, %arg13 : i32
      %107 = arith.index_cast %106 : i32 to index
      %108 = memref.load %arg2[%107] : memref<512xi32, #tpu.memory_space<smem>>
      %109 = arith.index_cast %108 : i32 to index
      %c0_56 = arith.constant 0 : index
      %110 = vector.load %arg4[%109, %c0_56] : memref<512x128xf32, #tpu.memory_space<vmem>>, vector<1x128xf32>
      %111 = arith.index_cast %arg13 : i32 to index
      %c0_57 = arith.constant 0 : index
      %112 = vector.load %arg11[%111, %c0_57] : memref<256x128xf32, #tpu.memory_space<vmem>>, vector<1x128xf32>
      tpu.vector_store %arg11[%111, %c0_57], %110 {strides = array<i32>} : memref<256x128xf32, #tpu.memory_space<vmem>>, vector<1x128xf32>,
      %c8_i32 = arith.constant 8 : i32
      %c0_i32_58 = arith.constant 0 : i32
      %113 = arith.cmpi eq, %c8_i32, %c0_i32_58 : i32
      %c1_i32_59 = arith.constant 1 : i32
      %114 = arith.select %113, %c1_i32_59, %c8_i32 : i32
      %115 = arith.remsi %arg13, %114 : i32
      %c0_i32_60 = arith.constant 0 : i32
      %116 = arith.cmpi ne, %115, %c0_i32_60 : i32
      %c0_i32_61 = arith.constant 0 : i32
      %117 = arith.cmpi slt, %115, %c0_i32_61 : i32
      %c0_i32_62 = arith.constant 0 : i32
      %118 = arith.cmpi slt, %114, %c0_i32_62 : i32
      %119 = arith.xori %117, %118 : i1
      %120 = arith.andi %119, %116 : i1
      %121 = arith.addi %115, %114 : i32
      %122 = arith.select %120, %121, %115 : i32
      %c0_i32_63 = arith.constant 0 : i32
      %c0_i32_64 = arith.constant 0 : i32
      %123 = tpu.memref_slice %arg3[%c0_i32_63, %c0_i32_64] : memref<1000x128xf32, #tpu.memory_space<any>> -> memref<1x128xf32, #tpu.memory_space<any>>
      %c0_i32_65 = arith.constant 0 : i32
      %124 = tpu.memref_slice %arg10[%arg13, %c0_i32_65] : memref<256x128xf32, #tpu.memory_space<vmem>> -> memref<1x128xf32, #tpu.memory_space<vmem>>
      %125 = tpu.memref_slice %arg12[%122] : memref<8x!tpu.dma_semaphore, #tpu.memory_space<semaphore_mem>> -> memref<1x!tpu.dma_semaphore, #tpu.memory_space<semaphore_mem>>
      %126 = tpu.memref_squeeze %125 : memref<1x!tpu.dma_semaphore, #tpu.memory_space<semaphore_mem>> -> memref<!tpu.dma_semaphore, #tpu.memory_space<semaphore_mem>>
      tpu.wait_dma2 semaphore(%126 : memref<!tpu.dma_semaphore, #tpu.memory_space<semaphore_mem>>) src(%123 : memref<1x128xf32, #tpu.memory_space<any>>) dst(%124 : memref<1x128xf32, #tpu.memory_space<vmem>>)
      %c8_i32_66 = arith.constant 8 : i32
      %127 = arith.addi %arg13, %c8_i32_66 : i32
      %c256_i32_67 = arith.constant 256 : i32
      %128 = arith.cmpi slt, %127, %c256_i32_67 : i32
      %129 = arith.extui %128 : i1 to i32
      %c0_i32_68 = arith.constant 0 : i32
      %130 = arith.cmpi ne, %129, %c0_i32_68 : i32
      scf.if %130 {
        %c8_i32_69 = arith.constant 8 : i32
        %131 = arith.addi %arg13, %c8_i32_69 : i32
        %132 = arith.addi %0, %131 : i32
        %133 = arith.index_cast %132 : i32 to index
        %134 = memref.load %arg1[%133] : memref<512xi32, #tpu.memory_space<smem>>
        %c8_i32_70 = arith.constant 8 : i32
        %c0_i32_71 = arith.constant 0 : i32
        %135 = arith.cmpi eq, %c8_i32_70, %c0_i32_71 : i32
        %c1_i32_72 = arith.constant 1 : i32
        %136 = arith.select %135, %c1_i32_72, %c8_i32_70 : i32
        %137 = arith.remsi %131, %136 : i32
        %c0_i32_73 = arith.constant 0 : i32
        %138 = arith.cmpi ne, %137, %c0_i32_73 : i32
        %c0_i32_74 = arith.constant 0 : i32
        %139 = arith.cmpi slt, %137, %c0_i32_74 : i32
        %c0_i32_75 = arith.constant 0 : i32
        %140 = arith.cmpi slt, %136, %c0_i32_75 : i32
        %141 = arith.xori %139, %140 : i1
        %142 = arith.andi %141, %138 : i1
        %143 = arith.addi %137, %136 : i32
        %144 = arith.select %142, %143, %137 : i32
        %c0_i32_76 = arith.constant 0 : i32
        %145 = tpu.memref_slice %arg3[%134, %c0_i32_76] : memref<1000x128xf32, #tpu.memory_space<any>> -> memref<1x128xf32, #tpu.memory_space<any>>
        %c0_i32_77 = arith.constant 0 : i32
        %146 = tpu.memref_slice %arg10[%131, %c0_i32_77] : memref<256x128xf32, #tpu.memory_space<vmem>> -> memref<1x128xf32, #tpu.memory_space<vmem>>
        %147 = tpu.memref_slice %arg12[%144] : memref<8x!tpu.dma_semaphore, #tpu.memory_space<semaphore_mem>> -> memref<1x!tpu.dma_semaphore, #tpu.memory_space<semaphore_mem>>
        %148 = tpu.memref_squeeze %147 : memref<1x!tpu.dma_semaphore, #tpu.memory_space<semaphore_mem>> -> memref<!tpu.dma_semaphore, #tpu.memory_space<semaphore_mem>>
        tpu.enqueue_dma source(%145 : memref<1x128xf32, #tpu.memory_space<any>>) target(%146 : memref<1x128xf32, #tpu.memory_space<vmem>>) target_semaphore(%148 : memref<!tpu.dma_semaphore, #tpu.memory_space<semaphore_mem>>)
      } else {
      }
    }
    %c256_i32_35 = arith.constant 256 : i32
    %c0 = arith.constant 0 : index
    %c0_36 = arith.constant 0 : index
    %58 = vector.load %arg10[%c0, %c0_36] : memref<256x128xf32, #tpu.memory_space<vmem>>, vector<256x128xf32>
    %c0_37 = arith.constant 0 : index
    %c0_38 = arith.constant 0 : index
    %59 = vector.load %arg11[%c0_37, %c0_38] : memref<256x128xf32, #tpu.memory_space<vmem>>, vector<256x128xf32>
    %60 = arith.addf %58, %59 : vector<256x128xf32>
    %c0_39 = arith.constant 0 : index
    %c0_40 = arith.constant 0 : index
    %61 = vector.load %arg6[%c0_39, %c0_40] : memref<256x1xi32, #tpu.memory_space<vmem>>, vector<256x1xi32>
    %c0_41 = arith.constant 0 : index
    %c0_42 = arith.constant 0 : index
    %62 = vector.load %arg5[%c0_41, %c0_42] : memref<2x128xf32, #tpu.memory_space<vmem>>, vector<2x128xf32>
    %cst = arith.constant 0.000000e+00 : f32
    %63 = vector.broadcast %cst : f32 to vector<256x128xf32>
    %c0_i32_43 = arith.constant 0 : i32
    %64 = vector.broadcast %c0_i32_43 : i32 to vector<256x1xi32>
    %65 = arith.cmpi eq, %61, %64 : vector<256x1xi32>
    %66 = vector.extract_strided_slice %62 {offsets = [0, 0], sizes = [1, 128], strides = [1, 1]} : vector<2x128xf32> to vector<1x128xf32>
    %67 = vector.shape_cast %65 : vector<256x1xi1> to vector<256x1xi1>
    %68 = vector.broadcast %67 : vector<256x1xi1> to vector<256x128xi1>
    %69 = vector.shape_cast %66 : vector<1x128xf32> to vector<1x128xf32>
    %70 = vector.broadcast %69 : vector<1x128xf32> to vector<256x128xf32>
    %71 = arith.select %68, %70, %63 : vector<256x128xi1>, vector<256x128xf32>
    %c1_i32_44 = arith.constant 1 : i32
    %72 = vector.broadcast %c1_i32_44 : i32 to vector<256x1xi32>
    %73 = arith.cmpi eq, %61, %72 : vector<256x1xi32>
    %74 = vector.extract_strided_slice %62 {offsets = [1, 0], sizes = [1, 128], strides = [1, 1]} : vector<2x128xf32> to vector<1x128xf32>
    %75 = vector.shape_cast %73 : vector<256x1xi1> to vector<256x1xi1>
    %76 = vector.broadcast %75 : vector<256x1xi1> to vector<256x128xi1>
    %77 = vector.shape_cast %74 : vector<1x128xf32> to vector<1x128xf32>
    %78 = vector.broadcast %77 : vector<1x128xf32> to vector<256x128xf32>
    %79 = arith.select %76, %78, %71 : vector<256x128xi1>, vector<256x128xf32>
    %80 = arith.addf %60, %79 : vector<256x128xf32>
    %cst_45 = arith.constant dense<0.000000e+00> : vector<256xf32>
    %81 = vector.multi_reduction <add>, %80, %cst_45 [1] : vector<256x128xf32> to vector<256xf32>
    %82 = vector.shape_cast %81 : vector<256xf32> to vector<256x1xf32>
    %83 = arith.mulf %80, %80 : vector<256x128xf32>
    %cst_46 = arith.constant dense<0.000000e+00> : vector<256xf32>
    %84 = vector.multi_reduction <add>, %83, %cst_46 [1] : vector<256x128xf32> to vector<256xf32>
    %85 = vector.shape_cast %84 : vector<256xf32> to vector<256x1xf32>
    %cst_47 = arith.constant 7.812500e-03 : f32
    %86 = vector.broadcast %cst_47 : f32 to vector<256x1xf32>
    %87 = arith.mulf %82, %86 : vector<256x1xf32>
    %cst_48 = arith.constant 7.812500e-03 : f32
    %88 = vector.broadcast %cst_48 : f32 to vector<256x1xf32>
    %89 = arith.mulf %85, %88 : vector<256x1xf32>
    %90 = arith.mulf %87, %87 : vector<256x1xf32>
    %91 = arith.subf %89, %90 : vector<256x1xf32>
    %92 = vector.broadcast %87 : vector<256x1xf32> to vector<256x128xf32>
    %93 = arith.subf %80, %92 : vector<256x128xf32>
    %cst_49 = arith.constant 9.99999996E-13 : f32
    %94 = vector.broadcast %cst_49 : f32 to vector<256x1xf32>
    %95 = arith.addf %91, %94 : vector<256x1xf32>
    %96 = math.rsqrt %95 : vector<256x1xf32>
    %97 = vector.broadcast %96 : vector<256x1xf32> to vector<256x128xf32>
    %98 = arith.mulf %93, %97 : vector<256x128xf32>
    %c0_50 = arith.constant 0 : index
    %c0_51 = arith.constant 0 : index
    %99 = vector.load %arg7[%c0_50, %c0_51] : memref<1x128xf32, #tpu.memory_space<vmem>>, vector<1x128xf32>
    %100 = vector.broadcast %99 : vector<1x128xf32> to vector<256x128xf32>
    %101 = arith.mulf %98, %100 : vector<256x128xf32>
    %c0_52 = arith.constant 0 : index
    %c0_53 = arith.constant 0 : index
    %102 = vector.load %arg8[%c0_52, %c0_53] : memref<1x128xf32, #tpu.memory_space<vmem>>, vector<1x128xf32>
    %103 = vector.broadcast %102 : vector<1x128xf32> to vector<256x128xf32>
    %104 = arith.addf %101, %103 : vector<256x128xf32>
    %c0_54 = arith.constant 0 : index
    %c0_55 = arith.constant 0 : index
    %105 = vector.load %arg9[%c0_54, %c0_55] : memref<256x128xf32, #tpu.memory_space<vmem>>, vector<256x128xf32>
    tpu.vector_store %arg9[%c0_54, %c0_55], %104 {strides = array<i32>} : memref<256x128xf32, #tpu.memory_space<vmem>>, vector<256x128xf32>,
    return
  }
  func.func @transform_1(%arg0: i32, %arg1: memref<512xi32, #tpu.memory_space<smem>>, %arg2: memref<512xi32, #tpu.memory_space<smem>>) -> (i32, i32) {
    %c0_i32 = arith.constant 0 : i32
    %c0_i32_0 = arith.constant 0 : i32
    %c0_i32_1 = arith.constant 0 : i32
    return %c0_i32, %c0_i32_0 : i32, i32
  }
  func.func @transform_2(%arg0: i32, %arg1: memref<512xi32, #tpu.memory_space<smem>>, %arg2: memref<512xi32, #tpu.memory_space<smem>>) -> (i32, i32) {
    %c0_i32 = arith.constant 0 : i32
    %c0_i32_0 = arith.constant 0 : i32
    %c0_i32_1 = arith.constant 0 : i32
    return %c0_i32, %c0_i32_0 : i32, i32
  }
  func.func @transform_3(%arg0: i32, %arg1: memref<512xi32, #tpu.memory_space<smem>>, %arg2: memref<512xi32, #tpu.memory_space<smem>>) -> (i32, i32) {
    %c0_i32 = arith.constant 0 : i32
    %c0_i32_0 = arith.constant 0 : i32
    return %arg0, %c0_i32 : i32, i32
  }
  func.func @transform_4(%arg0: i32, %arg1: memref<512xi32, #tpu.memory_space<smem>>, %arg2: memref<512xi32, #tpu.memory_space<smem>>) -> (i32, i32) {
    %c0_i32 = arith.constant 0 : i32
    %c0_i32_0 = arith.constant 0 : i32
    %c0_i32_1 = arith.constant 0 : i32
    return %c0_i32, %c0_i32_0 : i32, i32
  }
  func.func @transform_5(%arg0: i32, %arg1: memref<512xi32, #tpu.memory_space<smem>>, %arg2: memref<512xi32, #tpu.memory_space<smem>>) -> (i32, i32) {
    %c0_i32 = arith.constant 0 : i32
    %c0_i32_0 = arith.constant 0 : i32
    %c0_i32_1 = arith.constant 0 : i32
    return %c0_i32, %c0_i32_0 : i32, i32
  }
  func.func @transform_6(%arg0: i32, %arg1: memref<512xi32, #tpu.memory_space<smem>>, %arg2: memref<512xi32, #tpu.memory_space<smem>>) -> (i32, i32) {
    %c0_i32 = arith.constant 0 : i32
    %c0_i32_0 = arith.constant 0 : i32
    return %arg0, %c0_i32 : i32, i32
  }
}

</mosaic_0001>

<llo_original>
// kernel: tpu_custom_call.1
$region0: #{tpu_custom_call.1}
  #allocation0 [shape = 'u32[]', space=smem, size = 0x4, offset = 0x4, fixed_abs, tag = 'smem constant byte address 0x4 - core index']
  #allocation1 [shape = 'u32[72,128]{1,0:T(1,128)}', space=vmem, size = 0x9000, scoped, tag = 'internal scratch']
  #allocation2 [shape = 'f32[256,128]{1,0:T(8,128)}', space=vmem, size = 0x20000, scoped, tag = 'scratch operand']
  #allocation3 [shape = 'f32[256,128]{1,0:T(8,128)}', space=vmem, size = 0x20000, scoped, tag = 'scratch operand']
  #allocation4 [shape = 's32[8]{0}', space=sflag, size = 0x20, scoped, tag = 'scratch operand']
  #allocation5 [shape = 's32[1]{0}', space=sflag, size = 0x4, scoped, tag = 'scoped memory for tpu_custom_call.1']
  #allocation6 [shape = 'u8[2048]{0}', space=smem, size = 0x800, scoped, tag = 'prefetched SMEM operand 0']
  #allocation7 [shape = 'u8[2048]{0}', space=smem, size = 0x800, scoped, tag = 'prefetched SMEM operand 1']
  #allocation14 [shape = 's32[]', space=sflag, size = 0x4, offset = 0, fixed_abs, tag = 'sflag constant byte address 0x0 - dummy sync flag']
  #allocation15 [shape = 's32[]', space=sflag, size = 0x4, offset = 0, fixed_abs, tag = 'sflag constant byte address 0x0 - dummy sync flag']
  #allocation16 [shape = 'u32[]', space=smem, size = 0x4, offset = 0x44, fixed_abs, tag = 'smem constant byte address 0x44 - assertion arg 0']
  #allocation17 [shape = 'u32[]', space=smem, size = 0x4, offset = 0x48, fixed_abs, tag = 'smem constant byte address 0x48 - assertion arg 1']
  #allocation18 [shape = 's32[]', space=sflag, size = 0x4, offset = 0, fixed_abs, tag = 'sflag constant byte address 0x0 - dummy sync flag']
  #allocation19 [shape = 's32[]', space=sflag, size = 0x4, offset = 0, fixed_abs, tag = 'sflag constant byte address 0x0 - dummy sync flag']
  #allocation20 [shape = 's32[]', space=sflag, size = 0x4, offset = 0, fixed_abs, tag = 'sflag constant byte address 0x0 - dummy sync flag']
  #allocation21 [shape = 's32[]', space=sflag, size = 0x4, offset = 0, fixed_abs, tag = 'sflag constant byte address 0x0 - dummy sync flag']
  #allocation22 [shape = 's32[]', space=sflag, size = 0x4, offset = 0, fixed_abs, tag = 'sflag constant byte address 0x0 - dummy sync flag']
  #allocation23 [shape = 's32[]', space=sflag, size = 0x4, offset = 0, fixed_abs, tag = 'sflag constant byte address 0x0 - dummy sync flag']
  #allocation24 [shape = 's32[]', space=sflag, size = 0x4, offset = 0, fixed_abs, tag = 'sflag constant byte address 0x0 - dummy sync flag']
  #allocation25 [shape = 's32[]', space=sflag, size = 0x4, offset = 0, fixed_abs, tag = 'sflag constant byte address 0x0 - dummy sync flag']
  #allocation26 [shape = 's32[]', space=sflag, size = 0x4, offset = 0, fixed_abs, tag = 'sflag constant byte address 0x0 - dummy sync flag']
  #allocation27 [shape = 's32[]', space=sflag, size = 0x4, offset = 0, fixed_abs, tag = 'sflag constant byte address 0x0 - dummy sync flag']
  #allocation28 [shape = 's32[]', space=sflag, size = 0x4, offset = 0, fixed_abs, tag = 'sflag constant byte address 0x0 - dummy sync flag']
  #allocation29 [shape = 's32[]', space=sflag, size = 0x4, offset = 0, fixed_abs, tag = 'sflag constant byte address 0x0 - dummy sync flag']
  #allocation30 [shape = 's32[]', space=sflag, size = 0x4, offset = 0, fixed_abs, tag = 'sflag constant byte address 0x0 - dummy sync flag']
  #allocation31 [shape = 's32[]', space=sflag, size = 0x4, offset = 0, fixed_abs, tag = 'sflag constant byte address 0x0 - dummy sync flag']
  #allocation32 [shape = 's32[]', space=sflag, size = 0x4, offset = 0, fixed_abs, tag = 'sflag constant byte address 0x0 - dummy sync flag']
  #allocation33 [shape = 's32[]', space=sflag, size = 0x4, offset = 0, fixed_abs, tag = 'sflag constant byte address 0x0 - dummy sync flag']
  %s0 = inlined_call_operand.vmem [shape: s32[512], index: 0, kind: input, shape index: {}]
  %s1 = inlined_call_operand.hbm [shape: s32[512], index: 1, kind: input, shape index: {}]
  %s2 = inlined_call_operand.hbm [shape: f32[1000,128], index: 2, kind: input, shape index: {}]
  %s3 = inlined_call_operand.vmem [shape: f32[512,128], index: 3, kind: input, shape index: {}]
  %s4 = inlined_call_operand.hbm [shape: f32[2,128], index: 4, kind: input, shape index: {}]
  %s5 = inlined_call_operand.vmem [shape: s32[512,1], index: 5, kind: input, shape index: {}]
  %s6 = inlined_call_operand.vmem [shape: f32[1,128], index: 6, kind: input, shape index: {}]
  %s7 = inlined_call_operand.hbm [shape: f32[1,128], index: 7, kind: input, shape index: {}]
  %s8 = inlined_call_operand.hbm [shape: f32[512,128], index: 8, kind: output, shape index: {}]
  %s9 = sld [smem:[#allocation0]]
  $region108: #{tpu_custom_call.1} parent=0
    _
  %s11 = ssub.s32 1, %s9
  %s12 = scalar_select 0, %s11, %s9
  %s14 = sshll.u32 %s0, 4
  %s15 = int_to_ptr.vmem [resolvable:$true] %s14
  %17 = dma.vmem_to_smem %s15, 64, [#allocation6], [#allocation5]
  %s19 = sshll.u32 %s1, 4
  %s20 = int_to_ptr.hbm [resolvable:$true] %s19
  %22 = dma.hbm_to_smem %s20, 64, [#allocation7], [#allocation5]
  %24 = dma.done [#allocation5], 128
  %25 = sfence
  $region1: #{tpu_custom_call.1} parent=0
    #allocation8 [shape = 'u8[1024]{0}', space=vmem, size = 0x400, scoped, tag = 'input window, operand 4, single buffered']
    #allocation9 [shape = 's32[2]{0}', space=sflag, size = 0x8, scoped, tag = 'scoped memory for tpu_custom_call.1']
    #allocation10 [shape = 's32[2]{0}', space=sflag, size = 0x8, scoped, tag = 'scoped memory for tpu_custom_call.1']
    #allocation11 [shape = 'u8[512]{0}', space=vmem, size = 0x400, scoped, tag = 'input window, operand 7, single buffered']
    #allocation12 [shape = 's32[1]{0}', space=sflag, size = 0x4, scoped, tag = 'scoped memory for tpu_custom_call.1']
    #allocation13 [shape = 'u8[262144]{0}', space=vmem, size = 0x40000, scoped, tag = 'output window, operand 0']
    %26 = vsyncpa [#allocation9], 0
    %27 = vsyncpa [#allocation12], 0
    %28 = vsyncpa [#allocation10], 0
    %s29 = scalar_lea.sflag [#allocation10], 1
    %30 = vsyncpa %s29, 0
    loop: start=0, step=1, limit=4
    $region2: #{tpu_custom_call.1} parent=1 // loop_pre_header
      _
    $region3: #{tpu_custom_call.1} parent=1 // loop_header
      %s32 = sphi 0, %s36
      %p33 = scmp.ge.s32.totalorder %s32, 4
      %s40 = sphi 0, %s40
      %s42 = sphi 0, %s40
      %s43 = sphi 0, %s42
      %s57 = sphi 0, %s43
      %s61 = sphi 0, %s61
      %s63 = sphi 0, %s61
      %s64 = sphi 0, %s63
      %s78 = sphi 0, %s64
      %s84 = sphi 0, %s86
      %s87 = sphi 0, %s84
      %s88 = sphi 0, %s87
      %s104 = sphi 0, %s88
      %s108 = sphi 0, %s108
      %s110 = sphi 0, %s108
      %s111 = sphi 0, %s110
      %s125 = sphi 0, %s111
      %s129 = sphi 0, %s129
      %s131 = sphi 0, %s129
      %s132 = sphi 0, %s131
      %s146 = sphi 0, %s132
      %s152 = sphi 0, %s154
      %s155 = sphi 0, %s152
      %s156 = sphi 0, %s155
      %s172 = sphi 0, %s156
    $region4: #{tpu_custom_call.1} parent=1 // loop_header_branch
      %35 = sbr.rel (%p33) target = $region8
    $region5: #{tpu_custom_call.1} parent=1 // loop_body
      %s37 = ssub.s32 %s32, 1
      %s38 = ssub.s32 %s32, 2
      %s39 = sadd.s32 %s32, 1
      %s41 = sadd.s32 %s40, 1
      %p44 = scmp.eq.s32.totalorder %s32, 1
      %p45 = scmp.ne.s32.totalorder %s40, %s42
      %p46 = scmp.eq.s32.totalorder %s32, 0
      %p47 = por %p45, %p46
      %p48 = scmp.ne.s32.totalorder %s40, %s42
      %p49 = scmp.eq.s32.totalorder %s37, 1
      %p50 = por %p48, %p49
      %p51 = scmp.ne.s32.totalorder %s42, %s43
      %p52 = scmp.eq.s32.totalorder %s37, 0
      %p53 = por %p51, %p52
      %p54 = scmp.ne.s32.totalorder %s42, %s43
      %p55 = scmp.eq.s32.totalorder %s38, 1
      %p56 = por %p54, %p55
      %p58 = scmp.ne.s32.totalorder %s43, %s57
      %p59 = scmp.eq.s32.totalorder %s38, 0
      %p60 = por %p58, %p59
      %s62 = sadd.s32 %s61, 1
      %p65 = scmp.eq.s32.totalorder %s32, 1
      %p66 = scmp.ne.s32.totalorder %s61, %s63
      %p67 = scmp.eq.s32.totalorder %s32, 0
      %p68 = por %p66, %p67
      %p69 = scmp.ne.s32.totalorder %s61, %s63
      %p70 = scmp.eq.s32.totalorder %s37, 1
      %p71 = por %p69, %p70
      %p72 = scmp.ne.s32.totalorder %s63, %s64
      %p73 = scmp.eq.s32.totalorder %s37, 0
      %p74 = por %p72, %p73
      %p75 = scmp.ne.s32.totalorder %s63, %s64
      %p76 = scmp.eq.s32.totalorder %s38, 1
      %p77 = por %p75, %p76
      %p79 = scmp.ne.s32.totalorder %s64, %s78
      %p80 = scmp.eq.s32.totalorder %s38, 0
      %p81 = por %p79, %p80
      %s82 = ssub.s32 %s32, %s39
      %p83 = scmp.eq.s32.totalorder %s82, 0
      %s85 = sadd.s32 %s84, 1
      %s86 = scalar_select %p83, %s84, %s85
      %p89 = pneg %p83
      %p90 = scmp.eq.s32.totalorder %s32, 1
      %p91 = por %p89, %p90
      %p92 = scmp.ne.s32.totalorder %s84, %s87
      %p93 = scmp.eq.s32.totalorder %s32, 0
      %p94 = por %p92, %p93
      %p95 = scmp.ne.s32.totalorder %s84, %s87
      %p96 = scmp.eq.s32.totalorder %s37, 1
      %p97 = por %p95, %p96
      %p98 = scmp.ne.s32.totalorder %s87, %s88
      %p99 = scmp.eq.s32.totalorder %s37, 0
      %p100 = por %p98, %p99
      %p101 = scmp.ne.s32.totalorder %s87, %s88
      %p102 = scmp.eq.s32.totalorder %s38, 1
      %p103 = por %p101, %p102
      %p105 = scmp.ne.s32.totalorder %s88, %s104
      %p106 = scmp.eq.s32.totalorder %s38, 0
      %p107 = por %p105, %p106
      %s109 = sadd.s32 %s108, 1
      %p112 = scmp.eq.s32.totalorder %s32, 1
      %p113 = scmp.ne.s32.totalorder %s108, %s110
      %p114 = scmp.eq.s32.totalorder %s32, 0
      %p115 = por %p113, %p114
      %p116 = scmp.ne.s32.totalorder %s108, %s110
      %p117 = scmp.eq.s32.totalorder %s37, 1
      %p118 = por %p116, %p117
      %p119 = scmp.ne.s32.totalorder %s110, %s111
      %p120 = scmp.eq.s32.totalorder %s37, 0
      %p121 = por %p119, %p120
      %p122 = scmp.ne.s32.totalorder %s110, %s111
      %p123 = scmp.eq.s32.totalorder %s38, 1
      %p124 = por %p122, %p123
      %p126 = scmp.ne.s32.totalorder %s111, %s125
      %p127 = scmp.eq.s32.totalorder %s38, 0
      %p128 = por %p126, %p127
      %s130 = sadd.s32 %s129, 1
      %p133 = scmp.eq.s32.totalorder %s32, 1
      %p134 = scmp.ne.s32.totalorder %s129, %s131
      %p135 = scmp.eq.s32.totalorder %s32, 0
      %p136 = por %p134, %p135
      %p137 = scmp.ne.s32.totalorder %s129, %s131
      %p138 = scmp.eq.s32.totalorder %s37, 1
      %p139 = por %p137, %p138
      %p140 = scmp.ne.s32.totalorder %s131, %s132
      %p141 = scmp.eq.s32.totalorder %s37, 0
      %p142 = por %p140, %p141
      %p143 = scmp.ne.s32.totalorder %s131, %s132
      %p144 = scmp.eq.s32.totalorder %s38, 1
      %p145 = por %p143, %p144
      %p147 = scmp.ne.s32.totalorder %s132, %s146
      %p148 = scmp.eq.s32.totalorder %s38, 0
      %p149 = por %p147, %p148
      %s150 = ssub.s32 %s32, %s39
      %p151 = scmp.eq.s32.totalorder %s150, 0
      %s153 = sadd.s32 %s152, 1
      %s154 = scalar_select %p151, %s152, %s153
      %p157 = pneg %p151
      %p158 = scmp.eq.s32.totalorder %s32, 1
      %p159 = por %p157, %p158
      %p160 = scmp.ne.s32.totalorder %s152, %s155
      %p161 = scmp.eq.s32.totalorder %s32, 0
      %p162 = por %p160, %p161
      %p163 = scmp.ne.s32.totalorder %s152, %s155
      %p164 = scmp.eq.s32.totalorder %s37, 1
      %p165 = por %p163, %p164
      %p166 = scmp.ne.s32.totalorder %s155, %s156
      %p167 = scmp.eq.s32.totalorder %s37, 0
      %p168 = por %p166, %p167
      %p169 = scmp.ne.s32.totalorder %s155, %s156
      %p170 = scmp.eq.s32.totalorder %s38, 1
      %p171 = por %p169, %p170
      %p173 = scmp.ne.s32.totalorder %s156, %s172
      %p174 = scmp.eq.s32.totalorder %s38, 0
      %p175 = por %p173, %p174
      %p176 = scmp.le.s32.totalorder 1, %s32
      %p177 = scmp.lt.s32.totalorder %s32, 3
      %p178 = pnand %p176, %p177
      %p179 = pneg %p178
      // Predicated region
      $region9: #{tpu_custom_call.1} parent=5 // pred_check
        _
      $region10: #{tpu_custom_call.1} parent=5 // pred_check_branch
        %181 = sbr.rel (%p178) target = $region12
      $region11: #{tpu_custom_call.1} parent=5 // pred_region
        %s182 = ssub.s32 %s32, 1
        // Predicated region
        $region13: #{tpu_custom_call.1} parent=11 // pred_check
          %p183 = pneg %p53
        $region14: #{tpu_custom_call.1} parent=11 // pred_check_branch
          %185 = sbr.rel (%p183) target = $region16
        $region15: #{tpu_custom_call.1} parent=11 // pred_region
          _
        $region16: #{tpu_custom_call.1} parent=11 // pred_fallthru
          _
        // Predicated region
        $region17: #{tpu_custom_call.1} parent=11 // pred_check
          %p186 = pneg %p74
        $region18: #{tpu_custom_call.1} parent=11 // pred_check_branch
          %188 = sbr.rel (%p186) target = $region20
        $region19: #{tpu_custom_call.1} parent=11 // pred_region
          %190 = vsyncadd [#allocation9], 0
          %s192 = sshll.u32 %s4, 4
          %s193 = int_to_ptr.hbm [resolvable:$true] %s192
          %s194 = sshll.u32 [#allocation8], 4
          %s195 = int_to_ptr.vmem [resolvable:$true] %s194
          %197 = dma.hbm_to_vmem [thread:$0]  %s193, 32, %s195, [#allocation9]
        $region20: #{tpu_custom_call.1} parent=11 // pred_fallthru
          _
        // Predicated region
        $region21: #{tpu_custom_call.1} parent=11 // pred_check
          %p198 = pneg %p121
        $region22: #{tpu_custom_call.1} parent=11 // pred_check_branch
          %200 = sbr.rel (%p198) target = $region24
        $region23: #{tpu_custom_call.1} parent=11 // pred_region
          _
        $region24: #{tpu_custom_call.1} parent=11 // pred_fallthru
          _
        // Predicated region
        $region25: #{tpu_custom_call.1} parent=11 // pred_check
          %p201 = pneg %p142
        $region26: #{tpu_custom_call.1} parent=11 // pred_check_branch
          %203 = sbr.rel (%p201) target = $region28
        $region27: #{tpu_custom_call.1} parent=11 // pred_region
          %205 = vsyncadd [#allocation12], 0
          %s207 = sshll.u32 %s7, 4
          %s208 = int_to_ptr.hbm [resolvable:$true] %s207
          %s209 = sshll.u32 [#allocation11], 4
          %s210 = int_to_ptr.vmem [resolvable:$true] %s209
          %212 = dma.hbm_to_vmem [thread:$0]  %s208, 16, %s210, [#allocation12]
        $region28: #{tpu_custom_call.1} parent=11 // pred_fallthru
          _
      $region12: #{tpu_custom_call.1} parent=5 // pred_fallthru
        _
      %p213 = scmp.lt.s32.totalorder %s32, 2
      // Predicated region
      $region29: #{tpu_custom_call.1} parent=5 // pred_check
        %p214 = pneg %p213
      $region30: #{tpu_custom_call.1} parent=5 // pred_check_branch
        %216 = sbr.rel (%p214) target = $region32
      $region31: #{tpu_custom_call.1} parent=5 // pred_region
        // Predicated region
        $region33: #{tpu_custom_call.1} parent=31 // pred_check
          %p217 = pneg %p94
        $region34: #{tpu_custom_call.1} parent=31 // pred_check_branch
          %219 = sbr.rel (%p217) target = $region36
        $region35: #{tpu_custom_call.1} parent=31 // pred_region
          %s220 = smul.u32 32, %s32
          %p221 = scmp.lt.s32.totalorder %s220, 63
          %s222 = scalar_select %p221, %s220, 63
          %s223 = smul.addr %s222, 8
          %s224 = scalar_lea.vmem %s5, %s223
          %s225 = smul.u32 32, %s32
        $region36: #{tpu_custom_call.1} parent=31 // pred_fallthru
          _
      $region32: #{tpu_custom_call.1} parent=5 // pred_fallthru
        _
      %p226 = scmp.le.s32.totalorder 1, %s32
      %p227 = scmp.lt.s32.totalorder %s32, 3
      %p228 = pnand %p226, %p227
      %p229 = pneg %p228
      // Predicated region
      $region37: #{tpu_custom_call.1} parent=5 // pred_check
        _
      $region38: #{tpu_custom_call.1} parent=5 // pred_check_branch
        %231 = sbr.rel (%p228) target = $region40
      $region39: #{tpu_custom_call.1} parent=5 // pred_region
        %s232 = ssub.s32 %s32, 1
        // Predicated region
        $region41: #{tpu_custom_call.1} parent=39 // pred_check
          %p233 = pneg %p74
        $region42: #{tpu_custom_call.1} parent=39 // pred_check_branch
          %235 = sbr.rel (%p233) target = $region44
        $region43: #{tpu_custom_call.1} parent=39 // pred_region
          %237 = dma.done [#allocation9], 32
        $region44: #{tpu_custom_call.1} parent=39 // pred_fallthru
          _
        // Predicated region
        $region45: #{tpu_custom_call.1} parent=39 // pred_check
          %p238 = pneg %p142
        $region46: #{tpu_custom_call.1} parent=39 // pred_check_branch
          %240 = sbr.rel (%p238) target = $region48
        $region47: #{tpu_custom_call.1} parent=39 // pred_region
          %242 = dma.done [#allocation12], 16
        $region48: #{tpu_custom_call.1} parent=39 // pred_fallthru
          _
        %p243 = pneg %p53
        %p244 = pneg %p50
        %p245 = pneg %p74
        %p246 = pneg %p71
        %s247 = smul.u32 32, %s37
        %p248 = scmp.lt.s32.totalorder %s247, 63
        %s249 = scalar_select %p248, %s247, 63
        %s250 = smul.addr %s249, 8
        %s251 = scalar_lea.vmem %s5, %s250
        %p252 = pneg %p100
        %p253 = pneg %p97
        %p254 = pneg %p121
        %p255 = pneg %p118
        %p256 = pneg %p142
        %p257 = pneg %p139
        %p258 = pneg %p168
        %p259 = pneg %p165
        %s260 = sand.u32 %s155, 1
        %s261 = scalar_lea.sflag [#allocation10], %s260
        %s262 = sand.u32 %s155, 1
        %s263 = smul.addr %s262, 256
        %s264 = scalar_lea.vmem [#allocation13], %s263
        %s265 = smul.u32 32, %s37
        %p266 = scmp.lt.s32.totalorder %s265, 63
        %s267 = scalar_select %p266, %s265, 63
        %s268 = smul.addr %s267, 8
        %s269 = scalar_lea.vmem %s5, %s268
        %s270 = smul.u32 32, %s37
        %s271 = smul.u32 32, %s37
        %s272 = smul.u32 %s37, 256
        %s273 = sld [smem:[#allocation6 + %s272]]
        %s274 = scalar_lea.hbm %s2, %s273
        // Predicated region
        $region49: #{tpu_custom_call.1} parent=39 // pred_check
          _
        $region50: #{tpu_custom_call.1} parent=39 // pred_check_branch
          %276 = sbr.rel target = $region52
        $region51: #{tpu_custom_call.1} parent=39 // pred_region
          %277 = sst [smem:[#allocation16]] [#allocation15]
          %278 = sst [smem:[#allocation17]] [#allocation14]
        $region52: #{tpu_custom_call.1} parent=39 // pred_fallthru
          _
        %280 = shalt.err (0)
        %s282 = sshll.u32 %s274, 4
        %s283 = int_to_ptr.hbm [resolvable:$true] %s282
        %s284 = sshll.u32 [#allocation2], 4
        %s285 = int_to_ptr.vmem [resolvable:$true] %s284
        %287 = dma.hbm_to_vmem [thread:$0]  %s283, 16, %s285, [#allocation4]
        %s288 = sadd.s32 %s272, 1
        %s289 = sld [smem:[#allocation6 + %s288]]
        %s290 = scalar_lea.hbm %s2, %s289
        %s291 = scalar_lea.vmem [#allocation2], 1
        %s292 = scalar_lea.sflag [#allocation4], 1
        // Predicated region
        $region53: #{tpu_custom_call.1} parent=39 // pred_check
          _
        $region54: #{tpu_custom_call.1} parent=39 // pred_check_branch
          %294 = sbr.rel target = $region56
        $region55: #{tpu_custom_call.1} parent=39 // pred_region
          %295 = sst [smem:[#allocation16]] [#allocation19]
          %296 = sst [smem:[#allocation17]] [#allocation18]
        $region56: #{tpu_custom_call.1} parent=39 // pred_fallthru
          _
        %298 = shalt.err (0)
        %s300 = sshll.u32 %s290, 4
        %s301 = int_to_ptr.hbm [resolvable:$true] %s300
        %s302 = sshll.u32 %s291, 4
        %s303 = int_to_ptr.vmem [resolvable:$true] %s302
        %305 = dma.hbm_to_vmem [thread:$0]  %s301, 16, %s303, %s292
        %s306 = sadd.s32 %s272, 2
        %s307 = sld [smem:[#allocation6 + %s306]]
        %s308 = scalar_lea.hbm %s2, %s307
        %s309 = scalar_lea.vmem [#allocation2], 2
        %s310 = scalar_lea.sflag [#allocation4], 2
        // Predicated region
        $region57: #{tpu_custom_call.1} parent=39 // pred_check
          _
        $region58: #{tpu_custom_call.1} parent=39 // pred_check_branch
          %312 = sbr.rel target = $region60
        $region59: #{tpu_custom_call.1} parent=39 // pred_region
          %313 = sst [smem:[#allocation16]] [#allocation21]
          %314 = sst [smem:[#allocation17]] [#allocation20]
        $region60: #{tpu_custom_call.1} parent=39 // pred_fallthru
          _
        %316 = shalt.err (0)
        %s318 = sshll.u32 %s308, 4
        %s319 = int_to_ptr.hbm [resolvable:$true] %s318
        %s320 = sshll.u32 %s309, 4
        %s321 = int_to_ptr.vmem [resolvable:$true] %s320
        %323 = dma.hbm_to_vmem [thread:$0]  %s319, 16, %s321, %s310
        %s324 = sadd.s32 %s272, 3
        %s325 = sld [smem:[#allocation6 + %s324]]
        %s326 = scalar_lea.hbm %s2, %s325
        %s327 = scalar_lea.vmem [#allocation2], 3
        %s328 = scalar_lea.sflag [#allocation4], 3
        // Predicated region
        $region61: #{tpu_custom_call.1} parent=39 // pred_check
          _
        $region62: #{tpu_custom_call.1} parent=39 // pred_check_branch
          %330 = sbr.rel target = $region64
        $region63: #{tpu_custom_call.1} parent=39 // pred_region
          %331 = sst [smem:[#allocation16]] [#allocation23]
          %332 = sst [smem:[#allocation17]] [#allocation22]
        $region64: #{tpu_custom_call.1} parent=39 // pred_fallthru
          _
        %334 = shalt.err (0)
        %s336 = sshll.u32 %s326, 4
        %s337 = int_to_ptr.hbm [resolvable:$true] %s336
        %s338 = sshll.u32 %s327, 4
        %s339 = int_to_ptr.vmem [resolvable:$true] %s338
        %341 = dma.hbm_to_vmem [thread:$0]  %s337, 16, %s339, %s328
        %s342 = sadd.s32 %s272, 4
        %s343 = sld [smem:[#allocation6 + %s342]]
        %s344 = scalar_lea.hbm %s2, %s343
        %s345 = scalar_lea.vmem [#allocation2], 4
        %s346 = scalar_lea.sflag [#allocation4], 4
        // Predicated region
        $region65: #{tpu_custom_call.1} parent=39 // pred_check
          _
        $region66: #{tpu_custom_call.1} parent=39 // pred_check_branch
          %348 = sbr.rel target = $region68
        $region67: #{tpu_custom_call.1} parent=39 // pred_region
          %349 = sst [smem:[#allocation16]] [#allocation25]
          %350 = sst [smem:[#allocation17]] [#allocation24]
        $region68: #{tpu_custom_call.1} parent=39 // pred_fallthru
          _
        %352 = shalt.err (0)
        %s354 = sshll.u32 %s344, 4
        %s355 = int_to_ptr.hbm [resolvable:$true] %s354
        %s356 = sshll.u32 %s345, 4
        %s357 = int_to_ptr.vmem [resolvable:$true] %s356
        %359 = dma.hbm_to_vmem [thread:$0]  %s355, 16, %s357, %s346
        %s360 = sadd.s32 %s272, 5
        %s361 = sld [smem:[#allocation6 + %s360]]
        %s362 = scalar_lea.hbm %s2, %s361
        %s363 = scalar_lea.vmem [#allocation2], 5
        %s364 = scalar_lea.sflag [#allocation4], 5
        // Predicated region
        $region69: #{tpu_custom_call.1} parent=39 // pred_check
          _
        $region70: #{tpu_custom_call.1} parent=39 // pred_check_branch
          %366 = sbr.rel target = $region72
        $region71: #{tpu_custom_call.1} parent=39 // pred_region
          %367 = sst [smem:[#allocation16]] [#allocation27]
          %368 = sst [smem:[#allocation17]] [#allocation26]
        $region72: #{tpu_custom_call.1} parent=39 // pred_fallthru
          _
        %370 = shalt.err (0)
        %s372 = sshll.u32 %s362, 4
        %s373 = int_to_ptr.hbm [resolvable:$true] %s372
        %s374 = sshll.u32 %s363, 4
        %s375 = int_to_ptr.vmem [resolvable:$true] %s374
        %377 = dma.hbm_to_vmem [thread:$0]  %s373, 16, %s375, %s364
        %s378 = sadd.s32 %s272, 6
        %s379 = sld [smem:[#allocation6 + %s378]]
        %s380 = scalar_lea.hbm %s2, %s379
        %s381 = scalar_lea.vmem [#allocation2], 6
        %s382 = scalar_lea.sflag [#allocation4], 6
        // Predicated region
        $region73: #{tpu_custom_call.1} parent=39 // pred_check
          _
        $region74: #{tpu_custom_call.1} parent=39 // pred_check_branch
          %384 = sbr.rel target = $region76
        $region75: #{tpu_custom_call.1} parent=39 // pred_region
          %385 = sst [smem:[#allocation16]] [#allocation29]
          %386 = sst [smem:[#allocation17]] [#allocation28]
        $region76: #{tpu_custom_call.1} parent=39 // pred_fallthru
          _
        %388 = shalt.err (0)
        %s390 = sshll.u32 %s380, 4
        %s391 = int_to_ptr.hbm [resolvable:$true] %s390
        %s392 = sshll.u32 %s381, 4
        %s393 = int_to_ptr.vmem [resolvable:$true] %s392
        %395 = dma.hbm_to_vmem [thread:$0]  %s391, 16, %s393, %s382
        %s396 = sadd.s32 %s272, 7
        %s397 = sld [smem:[#allocation6 + %s396]]
        %s398 = scalar_lea.hbm %s2, %s397
        %s399 = scalar_lea.vmem [#allocation2], 7
        %s400 = scalar_lea.sflag [#allocation4], 7
        // Predicated region
        $region77: #{tpu_custom_call.1} parent=39 // pred_check
          _
        $region78: #{tpu_custom_call.1} parent=39 // pred_check_branch
          %402 = sbr.rel target = $region80
        $region79: #{tpu_custom_call.1} parent=39 // pred_region
          %403 = sst [smem:[#allocation16]] [#allocation31]
          %404 = sst [smem:[#allocation17]] [#allocation30]
        $region80: #{tpu_custom_call.1} parent=39 // pred_fallthru
          _
        %406 = shalt.err (0)
        %s408 = sshll.u32 %s398, 4
        %s409 = int_to_ptr.hbm [resolvable:$true] %s408
        %s410 = sshll.u32 %s399, 4
        %s411 = int_to_ptr.vmem [resolvable:$true] %s410
        %413 = dma.hbm_to_vmem [thread:$0]  %s409, 16, %s411, %s400
        loop: start=0, step=1, limit=256
        $region81: #{tpu_custom_call.1} parent=39 // loop_pre_header
          _
        $region82: #{tpu_custom_call.1} parent=39 // loop_header
          %s415 = sphi 0, %s419
          %p416 = scmp.ge.s32.totalorder %s415, 256
        $region83: #{tpu_custom_call.1} parent=39 // loop_header_branch
          %418 = sbr.rel (%p416) target = $region87
        $region84: #{tpu_custom_call.1} parent=39 // loop_body
          %s420 = sadd.s32 %s272, %s415
          %s421 = sld [smem:[#allocation7 + %s420]]
          %s422 = scalar_lea.vmem %s3, %s421
          %v423 = vld [vmem:[%s422] sm:$0x1]
          %s424 = scalar_lea.vmem [#allocation3], %s415
          %425 = vst [vmem:[%s424] sm:$0x1] %v423
          %p426 = scmp.lt.s32.totalorder %s415, 0
          %s427 = ssub.s32 0, %s415
          %s428 = scalar_select %p426, %s427, %s415
          %s429 = sand.u32 %s428, 7
          %s430 = ssub.s32 0, %s429
          %s431 = scalar_select %p426, %s430, %s429
          %p432 = scmp.ne.s32.totalorder %s431, 0
          %p433 = scmp.lt.s32.totalorder %s431, 0
          %p434 = pnand %p433, %p432
          %p435 = pneg %p434
          %s436 = sadd.s32 %s431, 8
          %s437 = scalar_select %p435, %s436, %s431
          %s438 = scalar_lea.sflag [#allocation4], %s437
          %s439 = smul.u32 1, 1
          %s440 = sshll.u32 %s439, 4
          %441 = dma.done %s438, %s440
          %s442 = sadd.s32 %s415, 8
          %p443 = scmp.lt.s32.totalorder %s442, 256
          // Predicated region
          $region88: #{tpu_custom_call.1} parent=84 // pred_check
            %p444 = pneg %p443
          $region89: #{tpu_custom_call.1} parent=84 // pred_check_branch
            %446 = sbr.rel (%p444) target = $region91
          $region90: #{tpu_custom_call.1} parent=84 // pred_region
            %s447 = sadd.s32 %s272, %s442
            %s448 = sld [smem:[#allocation6 + %s447]]
            %p449 = scmp.lt.s32.totalorder %s442, 0
            %s450 = ssub.s32 0, %s442
            %s451 = scalar_select %p449, %s450, %s442
            %s452 = sand.u32 %s451, 7
            %s453 = ssub.s32 0, %s452
            %s454 = scalar_select %p449, %s453, %s452
            %p455 = scmp.ne.s32.totalorder %s454, 0
            %p456 = scmp.lt.s32.totalorder %s454, 0
            %p457 = pnand %p456, %p455
            %p458 = pneg %p457
            %s459 = sadd.s32 %s454, 8
            %s460 = scalar_select %p458, %s459, %s454
            %s461 = scalar_lea.hbm %s2, %s448
            %s462 = scalar_lea.vmem [#allocation2], %s442
            %s463 = scalar_lea.sflag [#allocation4], %s460
            // Predicated region
            $region92: #{tpu_custom_call.1} parent=90 // pred_check
              _
            $region93: #{tpu_custom_call.1} parent=90 // pred_check_branch
              %465 = sbr.rel target = $region95
            $region94: #{tpu_custom_call.1} parent=90 // pred_region
              %466 = sst [smem:[#allocation16]] [#allocation33]
              %467 = sst [smem:[#allocation17]] [#allocation32]
            $region95: #{tpu_custom_call.1} parent=90 // pred_fallthru
              _
            %469 = shalt.err (0)
            %s471 = sshll.u32 %s461, 4
            %s472 = int_to_ptr.hbm [resolvable:$true] %s471
            %s473 = sshll.u32 %s462, 4
            %s474 = int_to_ptr.vmem [resolvable:$true] %s473
            %476 = dma.hbm_to_vmem [thread:$0]  %s472, 16, %s474, %s463
          $region91: #{tpu_custom_call.1} parent=84 // pred_fallthru
            _
        $region85: #{tpu_custom_call.1} parent=39 // loop_footer
          %s419 = sadd.s32 1, %s415
        $region86: #{tpu_custom_call.1} parent=39 // loop_footer_branch
          %414 = sbr.rel target = $region82
        $region87: #{tpu_custom_call.1} parent=39 // loop_exit
          _
        %v477 = vld [vmem:[#allocation2] sm:$0xff]
        %v478 = vld [vmem:[#allocation2 + $0x8] sm:$0xff]
        %v479 = vld [vmem:[#allocation2 + $0x10] sm:$0xff]
        %v480 = vld [vmem:[#allocation2 + $0x18] sm:$0xff]
        %v481 = vld [vmem:[#allocation2 + $0x20] sm:$0xff]
        %v482 = vld [vmem:[#allocation2 + $0x28] sm:$0xff]
        %v483 = vld [vmem:[#allocation2 + $0x30] sm:$0xff]
        %v484 = vld [vmem:[#allocation2 + $0x38] sm:$0xff]
        %v485 = vld [vmem:[#allocation2 + $0x40] sm:$0xff]
        %v486 = vld [vmem:[#allocation2 + $0x48] sm:$0xff]
        %v487 = vld [vmem:[#allocation2 + $0x50] sm:$0xff]
        %v488 = vld [vmem:[#allocation2 + $0x58] sm:$0xff]
        %v489 = vld [vmem:[#allocation2 + $0x60] sm:$0xff]
        %v490 = vld [vmem:[#allocation2 + $0x68] sm:$0xff]
        %v491 = vld [vmem:[#allocation2 + $0x70] sm:$0xff]
        %v492 = vld [vmem:[#allocation2 + $0x78] sm:$0xff]
        %v493 = vld [vmem:[#allocation2 + $0x80] sm:$0xff]
        %v494 = vld [vmem:[#allocation2 + $0x88] sm:$0xff]
        %v495 = vld [vmem:[#allocation2 + $0x90] sm:$0xff]
        %v496 = vld [vmem:[#allocation2 + $0x98] sm:$0xff]
        %v497 = vld [vmem:[#allocation2 + $0xa0] sm:$0xff]
        %v498 = vld [vmem:[#allocation2 + $0xa8] sm:$0xff]
        %v499 = vld [vmem:[#allocation2 + $0xb0] sm:$0xff]
        %v500 = vld [vmem:[#allocation2 + $0xb8] sm:$0xff]
        %v501 = vld [vmem:[#allocation2 + $0xc0] sm:$0xff]
        %v502 = vld [vmem:[#allocation2 + $0xc8] sm:$0xff]
        %v503 = vld [vmem:[#allocation2 + $0xd0] sm:$0xff]
        %v504 = vld [vmem:[#allocation2 + $0xd8] sm:$0xff]
        %v505 = vld [vmem:[#allocation2 + $0xe0] sm:$0xff]
        %v506 = vld [vmem:[#allocation2 + $0xe8] sm:$0xff]
        %v507 = vld [vmem:[#allocation2 + $0xf0] sm:$0xff]
        %v508 = vld [vmem:[#allocation2 + $0xf8] sm:$0xff]
        %v509 = vld [vmem:[#allocation3] sm:$0xff]
        %v510 = vld [vmem:[#allocation3 + $0x8] sm:$0xff]
        %v511 = vld [vmem:[#allocation3 + $0x10] sm:$0xff]
        %v512 = vld [vmem:[#allocation3 + $0x18] sm:$0xff]
        %v513 = vld [vmem:[#allocation3 + $0x20] sm:$0xff]
        %v514 = vld [vmem:[#allocation3 + $0x28] sm:$0xff]
        %v515 = vld [vmem:[#allocation3 + $0x30] sm:$0xff]
        %v516 = vld [vmem:[#allocation3 + $0x38] sm:$0xff]
        %v517 = vld [vmem:[#allocation3 + $0x40] sm:$0xff]
        %v518 = vld [vmem:[#allocation3 + $0x48] sm:$0xff]
        %v519 = vld [vmem:[#allocation3 + $0x50] sm:$0xff]
        %v520 = vld [vmem:[#allocation3 + $0x58] sm:$0xff]
        %v521 = vld [vmem:[#allocation3 + $0x60] sm:$0xff]
        %v522 = vld [vmem:[#allocation3 + $0x68] sm:$0xff]
        %v523 = vld [vmem:[#allocation3 + $0x70] sm:$0xff]
        %v524 = vld [vmem:[#allocation3 + $0x78] sm:$0xff]
        %v525 = vld [vmem:[#allocation3 + $0x80] sm:$0xff]
        %v526 = vld [vmem:[#allocation3 + $0x88] sm:$0xff]
        %v527 = vld [vmem:[#allocation3 + $0x90] sm:$0xff]
        %v528 = vld [vmem:[#allocation3 + $0x98] sm:$0xff]
        %v529 = vld [vmem:[#allocation3 + $0xa0] sm:$0xff]
        %v530 = vld [vmem:[#allocation3 + $0xa8] sm:$0xff]
        %v531 = vld [vmem:[#allocation3 + $0xb0] sm:$0xff]
        %v532 = vld [vmem:[#allocation3 + $0xb8] sm:$0xff]
        %v533 = vld [vmem:[#allocation3 + $0xc0] sm:$0xff]
        %v534 = vld [vmem:[#allocation3 + $0xc8] sm:$0xff]
        %v535 = vld [vmem:[#allocation3 + $0xd0] sm:$0xff]
        %v536 = vld [vmem:[#allocation3 + $0xd8] sm:$0xff]
        %v537 = vld [vmem:[#allocation3 + $0xe0] sm:$0xff]
        %v538 = vld [vmem:[#allocation3 + $0xe8] sm:$0xff]
        %v539 = vld [vmem:[#allocation3 + $0xf0] sm:$0xff]
        %v540 = vld [vmem:[#allocation3 + $0xf8] sm:$0xff]
        %v541 = vadd.f32 %v477, %v509
        %v542 = vadd.f32 %v478, %v510
        %v543 = vadd.f32 %v479, %v511
        %v544 = vadd.f32 %v480, %v512
        %v545 = vadd.f32 %v481, %v513
        %v546 = vadd.f32 %v482, %v514
        %v547 = vadd.f32 %v483, %v515
        %v548 = vadd.f32 %v484, %v516
        %v549 = vadd.f32 %v485, %v517
        %v550 = vadd.f32 %v486, %v518
        %v551 = vadd.f32 %v487, %v519
        %v552 = vadd.f32 %v488, %v520
        %v553 = vadd.f32 %v489, %v521
        %v554 = vadd.f32 %v490, %v522
        %v555 = vadd.f32 %v491, %v523
        %v556 = vadd.f32 %v492, %v524
        %v557 = vadd.f32 %v493, %v525
        %v558 = vadd.f32 %v494, %v526
        %v559 = vadd.f32 %v495, %v527
        %v560 = vadd.f32 %v496, %v528
        %v561 = vadd.f32 %v497, %v529
        %v562 = vadd.f32 %v498, %v530
        %v563 = vadd.f32 %v499, %v531
        %v564 = vadd.f32 %v500, %v532
        %v565 = vadd.f32 %v501, %v533
        %v566 = vadd.f32 %v502, %v534
        %v567 = vadd.f32 %v503, %v535
        %v568 = vadd.f32 %v504, %v536
        %v569 = vadd.f32 %v505, %v537
        %v570 = vadd.f32 %v506, %v538
        %v571 = vadd.f32 %v507, %v539
        %v572 = vadd.f32 %v508, %v540
        %v573 = vld [vmem:[%s269] sm:$0xff]
        %v574 = vld [vmem:[%s269 + $0x8] sm:$0xff]
        %v575 = vld [vmem:[%s269 + $0x10] sm:$0xff]
        %v576 = vld [vmem:[%s269 + $0x18] sm:$0xff]
        %v577 = vld [vmem:[%s269 + $0x20] sm:$0xff]
        %v578 = vld [vmem:[%s269 + $0x28] sm:$0xff]
        %v579 = vld [vmem:[%s269 + $0x30] sm:$0xff]
        %v580 = vld [vmem:[%s269 + $0x38] sm:$0xff]
        %v581 = vld [vmem:[%s269 + $0x40] sm:$0xff]
        %v582 = vld [vmem:[%s269 + $0x48] sm:$0xff]
        %v583 = vld [vmem:[%s269 + $0x50] sm:$0xff]
        %v584 = vld [vmem:[%s269 + $0x58] sm:$0xff]
        %v585 = vld [vmem:[%s269 + $0x60] sm:$0xff]
        %v586 = vld [vmem:[%s269 + $0x68] sm:$0xff]
        %v587 = vld [vmem:[%s269 + $0x70] sm:$0xff]
        %v588 = vld [vmem:[%s269 + $0x78] sm:$0xff]
        %v589 = vld [vmem:[%s269 + $0x80] sm:$0xff]
        %v590 = vld [vmem:[%s269 + $0x88] sm:$0xff]
        %v591 = vld [vmem:[%s269 + $0x90] sm:$0xff]
        %v592 = vld [vmem:[%s269 + $0x98] sm:$0xff]
        %v593 = vld [vmem:[%s269 + $0xa0] sm:$0xff]
        %v594 = vld [vmem:[%s269 + $0xa8] sm:$0xff]
        %v595 = vld [vmem:[%s269 + $0xb0] sm:$0xff]
        %v596 = vld [vmem:[%s269 + $0xb8] sm:$0xff]
        %v597 = vld [vmem:[%s269 + $0xc0] sm:$0xff]
        %v598 = vld [vmem:[%s269 + $0xc8] sm:$0xff]
        %v599 = vld [vmem:[%s269 + $0xd0] sm:$0xff]
        %v600 = vld [vmem:[%s269 + $0xd8] sm:$0xff]
        %v601 = vld [vmem:[%s269 + $0xe0] sm:$0xff]
        %v602 = vld [vmem:[%s269 + $0xe8] sm:$0xff]
        %v603 = vld [vmem:[%s269 + $0xf0] sm:$0xff]
        %v604 = vld [vmem:[%s269 + $0xf8] sm:$0xff]
        %v605 = vld [vmem:[#allocation8] sm:$0x3]
        %vm606 = vcmp.eq.s32.totalorder %v573, 0
        %vm607 = vcmp.eq.s32.totalorder %v574, 0
        %vm608 = vcmp.eq.s32.totalorder %v575, 0
        %vm609 = vcmp.eq.s32.totalorder %v576, 0
        %vm610 = vcmp.eq.s32.totalorder %v577, 0
        %vm611 = vcmp.eq.s32.totalorder %v578, 0
        %vm612 = vcmp.eq.s32.totalorder %v579, 0
        %vm613 = vcmp.eq.s32.totalorder %v580, 0
        %vm614 = vcmp.eq.s32.totalorder %v581, 0
        %vm615 = vcmp.eq.s32.totalorder %v582, 0
        %vm616 = vcmp.eq.s32.totalorder %v583, 0
        %vm617 = vcmp.eq.s32.totalorder %v584, 0
        %vm618 = vcmp.eq.s32.totalorder %v585, 0
        %vm619 = vcmp.eq.s32.totalorder %v586, 0
        %vm620 = vcmp.eq.s32.totalorder %v587, 0
        %vm621 = vcmp.eq.s32.totalorder %v588, 0
        %vm622 = vcmp.eq.s32.totalorder %v589, 0
        %vm623 = vcmp.eq.s32.totalorder %v590, 0
        %vm624 = vcmp.eq.s32.totalorder %v591, 0
        %vm625 = vcmp.eq.s32.totalorder %v592, 0
        %vm626 = vcmp.eq.s32.totalorder %v593, 0
        %vm627 = vcmp.eq.s32.totalorder %v594, 0
        %vm628 = vcmp.eq.s32.totalorder %v595, 0
        %vm629 = vcmp.eq.s32.totalorder %v596, 0
        %vm630 = vcmp.eq.s32.totalorder %v597, 0
        %vm631 = vcmp.eq.s32.totalorder %v598, 0
        %vm632 = vcmp.eq.s32.totalorder %v599, 0
        %vm633 = vcmp.eq.s32.totalorder %v600, 0
        %vm634 = vcmp.eq.s32.totalorder %v601, 0
        %vm635 = vcmp.eq.s32.totalorder %v602, 0
        %vm636 = vcmp.eq.s32.totalorder %v603, 0
        %vm637 = vcmp.eq.s32.totalorder %v604, 0
        %v638 = vsel %vm606, 1, 0
        %v639 = vsel %vm607, 1, 0
        %v640 = vsel %vm608, 1, 0
        %v641 = vsel %vm609, 1, 0
        %v642 = vsel %vm610, 1, 0
        %v643 = vsel %vm611, 1, 0
        %v644 = vsel %vm612, 1, 0
        %v645 = vsel %vm613, 1, 0
        %v646 = vsel %vm614, 1, 0
        %v647 = vsel %vm615, 1, 0
        %v648 = vsel %vm616, 1, 0
        %v649 = vsel %vm617, 1, 0
        %v650 = vsel %vm618, 1, 0
        %v651 = vsel %vm619, 1, 0
        %v652 = vsel %vm620, 1, 0
        %v653 = vsel %vm621, 1, 0
        %v654 = vsel %vm622, 1, 0
        %v655 = vsel %vm623, 1, 0
        %v656 = vsel %vm624, 1, 0
        %v657 = vsel %vm625, 1, 0
        %v658 = vsel %vm626, 1, 0
        %v659 = vsel %vm627, 1, 0
        %v660 = vsel %vm628, 1, 0
        %v661 = vsel %vm629, 1, 0
        %v662 = vsel %vm630, 1, 0
        %v663 = vsel %vm631, 1, 0
        %v664 = vsel %vm632, 1, 0
        %v665 = vsel %vm633, 1, 0
        %v666 = vsel %vm634, 1, 0
        %v667 = vsel %vm635, 1, 0
        %v668 = vsel %vm636, 1, 0
        %v669 = vsel %vm637, 1, 0
        %670 = vset.pattern.permute.xlu0 0
        %671 = vperm.xlu0 %670, %v638
        %v672 = vpop.permute.xlu0 %671
        %673 = vset.pattern.permute.xlu0 0
        %674 = vperm.xlu0 %673, %v639
        %v675 = vpop.permute.xlu0 %674
        %676 = vset.pattern.permute.xlu0 0
        %677 = vperm.xlu0 %676, %v640
        %v678 = vpop.permute.xlu0 %677
        %679 = vset.pattern.permute.xlu0 0
        %680 = vperm.xlu0 %679, %v641
        %v681 = vpop.permute.xlu0 %680
        %682 = vset.pattern.permute.xlu0 0
        %683 = vperm.xlu0 %682, %v642
        %v684 = vpop.permute.xlu0 %683
        %685 = vset.pattern.permute.xlu0 0
        %686 = vperm.xlu0 %685, %v643
        %v687 = vpop.permute.xlu0 %686
        %688 = vset.pattern.permute.xlu0 0
        %689 = vperm.xlu0 %688, %v644
        %v690 = vpop.permute.xlu0 %689
        %691 = vset.pattern.permute.xlu0 0
        %692 = vperm.xlu0 %691, %v645
        %v693 = vpop.permute.xlu0 %692
        %694 = vset.pattern.permute.xlu0 0
        %695 = vperm.xlu0 %694, %v646
        %v696 = vpop.permute.xlu0 %695
        %697 = vset.pattern.permute.xlu0 0
        %698 = vperm.xlu0 %697, %v647
        %v699 = vpop.permute.xlu0 %698
        %700 = vset.pattern.permute.xlu0 0
        %701 = vperm.xlu0 %700, %v648
        %v702 = vpop.permute.xlu0 %701
        %703 = vset.pattern.permute.xlu0 0
        %704 = vperm.xlu0 %703, %v649
        %v705 = vpop.permute.xlu0 %704
        %706 = vset.pattern.permute.xlu0 0
        %707 = vperm.xlu0 %706, %v650
        %v708 = vpop.permute.xlu0 %707
        %709 = vset.pattern.permute.xlu0 0
        %710 = vperm.xlu0 %709, %v651
        %v711 = vpop.permute.xlu0 %710
        %712 = vset.pattern.permute.xlu0 0
        %713 = vperm.xlu0 %712, %v652
        %v714 = vpop.permute.xlu0 %713
        %715 = vset.pattern.permute.xlu0 0
        %716 = vperm.xlu0 %715, %v653
        %v717 = vpop.permute.xlu0 %716
        %718 = vset.pattern.permute.xlu0 0
        %719 = vperm.xlu0 %718, %v654
        %v720 = vpop.permute.xlu0 %719
        %721 = vset.pattern.permute.xlu0 0
        %722 = vperm.xlu0 %721, %v655
        %v723 = vpop.permute.xlu0 %722
        %724 = vset.pattern.permute.xlu0 0
        %725 = vperm.xlu0 %724, %v656
        %v726 = vpop.permute.xlu0 %725
        %727 = vset.pattern.permute.xlu0 0
        %728 = vperm.xlu0 %727, %v657
        %v729 = vpop.permute.xlu0 %728
        %730 = vset.pattern.permute.xlu0 0
        %731 = vperm.xlu0 %730, %v658
        %v732 = vpop.permute.xlu0 %731
        %733 = vset.pattern.permute.xlu0 0
        %734 = vperm.xlu0 %733, %v659
        %v735 = vpop.permute.xlu0 %734
        %736 = vset.pattern.permute.xlu0 0
        %737 = vperm.xlu0 %736, %v660
        %v738 = vpop.permute.xlu0 %737
        %739 = vset.pattern.permute.xlu0 0
        %740 = vperm.xlu0 %739, %v661
        %v741 = vpop.permute.xlu0 %740
        %742 = vset.pattern.permute.xlu0 0
        %743 = vperm.xlu0 %742, %v662
        %v744 = vpop.permute.xlu0 %743
        %745 = vset.pattern.permute.xlu0 0
        %746 = vperm.xlu0 %745, %v663
        %v747 = vpop.permute.xlu0 %746
        %748 = vset.pattern.permute.xlu0 0
        %749 = vperm.xlu0 %748, %v664
        %v750 = vpop.permute.xlu0 %749
        %751 = vset.pattern.permute.xlu0 0
        %752 = vperm.xlu0 %751, %v665
        %v753 = vpop.permute.xlu0 %752
        %754 = vset.pattern.permute.xlu0 0
        %755 = vperm.xlu0 %754, %v666
        %v756 = vpop.permute.xlu0 %755
        %757 = vset.pattern.permute.xlu0 0
        %758 = vperm.xlu0 %757, %v667
        %v759 = vpop.permute.xlu0 %758
        %760 = vset.pattern.permute.xlu0 0
        %761 = vperm.xlu0 %760, %v668
        %v762 = vpop.permute.xlu0 %761
        %763 = vset.pattern.permute.xlu0 0
        %764 = vperm.xlu0 %763, %v669
        %v765 = vpop.permute.xlu0 %764
        %vm766 = vcmp.eq.s32.totalorder %v672, 1
        %vm767 = vcmp.eq.s32.totalorder %v675, 1
        %vm768 = vcmp.eq.s32.totalorder %v678, 1
        %vm769 = vcmp.eq.s32.totalorder %v681, 1
        %vm770 = vcmp.eq.s32.totalorder %v684, 1
        %vm771 = vcmp.eq.s32.totalorder %v687, 1
        %vm772 = vcmp.eq.s32.totalorder %v690, 1
        %vm773 = vcmp.eq.s32.totalorder %v693, 1
        %vm774 = vcmp.eq.s32.totalorder %v696, 1
        %vm775 = vcmp.eq.s32.totalorder %v699, 1
        %vm776 = vcmp.eq.s32.totalorder %v702, 1
        %vm777 = vcmp.eq.s32.totalorder %v705, 1
        %vm778 = vcmp.eq.s32.totalorder %v708, 1
        %vm779 = vcmp.eq.s32.totalorder %v711, 1
        %vm780 = vcmp.eq.s32.totalorder %v714, 1
        %vm781 = vcmp.eq.s32.totalorder %v717, 1
        %vm782 = vcmp.eq.s32.totalorder %v720, 1
        %vm783 = vcmp.eq.s32.totalorder %v723, 1
        %vm784 = vcmp.eq.s32.totalorder %v726, 1
        %vm785 = vcmp.eq.s32.totalorder %v729, 1
        %vm786 = vcmp.eq.s32.totalorder %v732, 1
        %vm787 = vcmp.eq.s32.totalorder %v735, 1
        %vm788 = vcmp.eq.s32.totalorder %v738, 1
        %vm789 = vcmp.eq.s32.totalorder %v741, 1
        %vm790 = vcmp.eq.s32.totalorder %v744, 1
        %vm791 = vcmp.eq.s32.totalorder %v747, 1
        %vm792 = vcmp.eq.s32.totalorder %v750, 1
        %vm793 = vcmp.eq.s32.totalorder %v753, 1
        %vm794 = vcmp.eq.s32.totalorder %v756, 1
        %vm795 = vcmp.eq.s32.totalorder %v759, 1
        %vm796 = vcmp.eq.s32.totalorder %v762, 1
        %vm797 = vcmp.eq.s32.totalorder %v765, 1
        %v798 = vperm.slane %v605, 0
        %v799 = vsel %vm766, %v798, 0.0
        %v800 = vsel %vm767, %v798, 0.0
        %v801 = vsel %vm768, %v798, 0.0
        %v802 = vsel %vm769, %v798, 0.0
        %v803 = vsel %vm770, %v798, 0.0
        %v804 = vsel %vm771, %v798, 0.0
        %v805 = vsel %vm772, %v798, 0.0
        %v806 = vsel %vm773, %v798, 0.0
        %v807 = vsel %vm774, %v798, 0.0
        %v808 = vsel %vm775, %v798, 0.0
        %v809 = vsel %vm776, %v798, 0.0
        %v810 = vsel %vm777, %v798, 0.0
        %v811 = vsel %vm778, %v798, 0.0
        %v812 = vsel %vm779, %v798, 0.0
        %v813 = vsel %vm780, %v798, 0.0
        %v814 = vsel %vm781, %v798, 0.0
        %v815 = vsel %vm782, %v798, 0.0
        %v816 = vsel %vm783, %v798, 0.0
        %v817 = vsel %vm784, %v798, 0.0
        %v818 = vsel %vm785, %v798, 0.0
        %v819 = vsel %vm786, %v798, 0.0
        %v820 = vsel %vm787, %v798, 0.0
        %v821 = vsel %vm788, %v798, 0.0
        %v822 = vsel %vm789, %v798, 0.0
        %v823 = vsel %vm790, %v798, 0.0
        %v824 = vsel %vm791, %v798, 0.0
        %v825 = vsel %vm792, %v798, 0.0
        %v826 = vsel %vm793, %v798, 0.0
        %v827 = vsel %vm794, %v798, 0.0
        %v828 = vsel %vm795, %v798, 0.0
        %v829 = vsel %vm796, %v798, 0.0
        %v830 = vsel %vm797, %v798, 0.0
        %vm831 = vcmp.eq.s32.totalorder %v573, 1
        %vm832 = vcmp.eq.s32.totalorder %v574, 1
        %vm833 = vcmp.eq.s32.totalorder %v575, 1
        %vm834 = vcmp.eq.s32.totalorder %v576, 1
        %vm835 = vcmp.eq.s32.totalorder %v577, 1
        %vm836 = vcmp.eq.s32.totalorder %v578, 1
        %vm837 = vcmp.eq.s32.totalorder %v579, 1
        %vm838 = vcmp.eq.s32.totalorder %v580, 1
        %vm839 = vcmp.eq.s32.totalorder %v581, 1
        %vm840 = vcmp.eq.s32.totalorder %v582, 1
        %vm841 = vcmp.eq.s32.totalorder %v583, 1
        %vm842 = vcmp.eq.s32.totalorder %v584, 1
        %vm843 = vcmp.eq.s32.totalorder %v585, 1
        %vm844 = vcmp.eq.s32.totalorder %v586, 1
        %vm845 = vcmp.eq.s32.totalorder %v587, 1
        %vm846 = vcmp.eq.s32.totalorder %v588, 1
        %vm847 = vcmp.eq.s32.totalorder %v589, 1
        %vm848 = vcmp.eq.s32.totalorder %v590, 1
        %vm849 = vcmp.eq.s32.totalorder %v591, 1
        %vm850 = vcmp.eq.s32.totalorder %v592, 1
        %vm851 = vcmp.eq.s32.totalorder %v593, 1
        %vm852 = vcmp.eq.s32.totalorder %v594, 1
        %vm853 = vcmp.eq.s32.totalorder %v595, 1
        %vm854 = vcmp.eq.s32.totalorder %v596, 1
        %vm855 = vcmp.eq.s32.totalorder %v597, 1
        %vm856 = vcmp.eq.s32.totalorder %v598, 1
        %vm857 = vcmp.eq.s32.totalorder %v599, 1
        %vm858 = vcmp.eq.s32.totalorder %v600, 1
        %vm859 = vcmp.eq.s32.totalorder %v601, 1
        %vm860 = vcmp.eq.s32.totalorder %v602, 1
        %vm861 = vcmp.eq.s32.totalorder %v603, 1
        %vm862 = vcmp.eq.s32.totalorder %v604, 1
        %v863 = vsel %vm831, 1, 0
        %v864 = vsel %vm832, 1, 0
        %v865 = vsel %vm833, 1, 0
        %v866 = vsel %vm834, 1, 0
        %v867 = vsel %vm835, 1, 0
        %v868 = vsel %vm836, 1, 0
        %v869 = vsel %vm837, 1, 0
        %v870 = vsel %vm838, 1, 0
        %v871 = vsel %vm839, 1, 0
        %v872 = vsel %vm840, 1, 0
        %v873 = vsel %vm841, 1, 0
        %v874 = vsel %vm842, 1, 0
        %v875 = vsel %vm843, 1, 0
        %v876 = vsel %vm844, 1, 0
        %v877 = vsel %vm845, 1, 0
        %v878 = vsel %vm846, 1, 0
        %v879 = vsel %vm847, 1, 0
        %v880 = vsel %vm848, 1, 0
        %v881 = vsel %vm849, 1, 0
        %v882 = vsel %vm850, 1, 0
        %v883 = vsel %vm851, 1, 0
        %v884 = vsel %vm852, 1, 0
        %v885 = vsel %vm853, 1, 0
        %v886 = vsel %vm854, 1, 0
        %v887 = vsel %vm855, 1, 0
        %v888 = vsel %vm856, 1, 0
        %v889 = vsel %vm857, 1, 0
        %v890 = vsel %vm858, 1, 0
        %v891 = vsel %vm859, 1, 0
        %v892 = vsel %vm860, 1, 0
        %v893 = vsel %vm861, 1, 0
        %v894 = vsel %vm862, 1, 0
        %895 = vset.pattern.permute.xlu0 0
        %896 = vperm.xlu0 %895, %v863
        %v897 = vpop.permute.xlu0 %896
        %898 = vset.pattern.permute.xlu0 0
        %899 = vperm.xlu0 %898, %v864
        %v900 = vpop.permute.xlu0 %899
        %901 = vset.pattern.permute.xlu0 0
        %902 = vperm.xlu0 %901, %v865
        %v903 = vpop.permute.xlu0 %902
        %904 = vset.pattern.permute.xlu0 0
        %905 = vperm.xlu0 %904, %v866
        %v906 = vpop.permute.xlu0 %905
        %907 = vset.pattern.permute.xlu0 0
        %908 = vperm.xlu0 %907, %v867
        %v909 = vpop.permute.xlu0 %908
        %910 = vset.pattern.permute.xlu0 0
        %911 = vperm.xlu0 %910, %v868
        %v912 = vpop.permute.xlu0 %911
        %913 = vset.pattern.permute.xlu0 0
        %914 = vperm.xlu0 %913, %v869
        %v915 = vpop.permute.xlu0 %914
        %916 = vset.pattern.permute.xlu0 0
        %917 = vperm.xlu0 %916, %v870
        %v918 = vpop.permute.xlu0 %917
        %919 = vset.pattern.permute.xlu0 0
        %920 = vperm.xlu0 %919, %v871
        %v921 = vpop.permute.xlu0 %920
        %922 = vset.pattern.permute.xlu0 0
        %923 = vperm.xlu0 %922, %v872
        %v924 = vpop.permute.xlu0 %923
        %925 = vset.pattern.permute.xlu0 0
        %926 = vperm.xlu0 %925, %v873
        %v927 = vpop.permute.xlu0 %926
        %928 = vset.pattern.permute.xlu0 0
        %929 = vperm.xlu0 %928, %v874
        %v930 = vpop.permute.xlu0 %929
        %931 = vset.pattern.permute.xlu0 0
        %932 = vperm.xlu0 %931, %v875
        %v933 = vpop.permute.xlu0 %932
        %934 = vset.pattern.permute.xlu0 0
        %935 = vperm.xlu0 %934, %v876
        %v936 = vpop.permute.xlu0 %935
        %937 = vset.pattern.permute.xlu0 0
        %938 = vperm.xlu0 %937, %v877
        %v939 = vpop.permute.xlu0 %938
        %940 = vset.pattern.permute.xlu0 0
        %941 = vperm.xlu0 %940, %v878
        %v942 = vpop.permute.xlu0 %941
        %943 = vset.pattern.permute.xlu0 0
        %944 = vperm.xlu0 %943, %v879
        %v945 = vpop.permute.xlu0 %944
        %946 = vset.pattern.permute.xlu0 0
        %947 = vperm.xlu0 %946, %v880
        %v948 = vpop.permute.xlu0 %947
        %949 = vset.pattern.permute.xlu0 0
        %950 = vperm.xlu0 %949, %v881
        %v951 = vpop.permute.xlu0 %950
        %952 = vset.pattern.permute.xlu0 0
        %953 = vperm.xlu0 %952, %v882
        %v954 = vpop.permute.xlu0 %953
        %955 = vset.pattern.permute.xlu0 0
        %956 = vperm.xlu0 %955, %v883
        %v957 = vpop.permute.xlu0 %956
        %958 = vset.pattern.permute.xlu0 0
        %959 = vperm.xlu0 %958, %v884
        %v960 = vpop.permute.xlu0 %959
        %961 = vset.pattern.permute.xlu0 0
        %962 = vperm.xlu0 %961, %v885
        %v963 = vpop.permute.xlu0 %962
        %964 = vset.pattern.permute.xlu0 0
        %965 = vperm.xlu0 %964, %v886
        %v966 = vpop.permute.xlu0 %965
        %967 = vset.pattern.permute.xlu0 0
        %968 = vperm.xlu0 %967, %v887
        %v969 = vpop.permute.xlu0 %968
        %970 = vset.pattern.permute.xlu0 0
        %971 = vperm.xlu0 %970, %v888
        %v972 = vpop.permute.xlu0 %971
        %973 = vset.pattern.permute.xlu0 0
        %974 = vperm.xlu0 %973, %v889
        %v975 = vpop.permute.xlu0 %974
        %976 = vset.pattern.permute.xlu0 0
        %977 = vperm.xlu0 %976, %v890
        %v978 = vpop.permute.xlu0 %977
        %979 = vset.pattern.permute.xlu0 0
        %980 = vperm.xlu0 %979, %v891
        %v981 = vpop.permute.xlu0 %980
        %982 = vset.pattern.permute.xlu0 0
        %983 = vperm.xlu0 %982, %v892
        %v984 = vpop.permute.xlu0 %983
        %985 = vset.pattern.permute.xlu0 0
        %986 = vperm.xlu0 %985, %v893
        %v987 = vpop.permute.xlu0 %986
        %988 = vset.pattern.permute.xlu0 0
        %989 = vperm.xlu0 %988, %v894
        %v990 = vpop.permute.xlu0 %989
        %vm991 = vcmp.eq.s32.totalorder %v897, 1
        %vm992 = vcmp.eq.s32.totalorder %v900, 1
        %vm993 = vcmp.eq.s32.totalorder %v903, 1
        %vm994 = vcmp.eq.s32.totalorder %v906, 1
        %vm995 = vcmp.eq.s32.totalorder %v909, 1
        %vm996 = vcmp.eq.s32.totalorder %v912, 1
        %vm997 = vcmp.eq.s32.totalorder %v915, 1
        %vm998 = vcmp.eq.s32.totalorder %v918, 1
        %vm999 = vcmp.eq.s32.totalorder %v921, 1
        %vm1000 = vcmp.eq.s32.totalorder %v924, 1
        %vm1001 = vcmp.eq.s32.totalorder %v927, 1
        %vm1002 = vcmp.eq.s32.totalorder %v930, 1
        %vm1003 = vcmp.eq.s32.totalorder %v933, 1
        %vm1004 = vcmp.eq.s32.totalorder %v936, 1
        %vm1005 = vcmp.eq.s32.totalorder %v939, 1
        %vm1006 = vcmp.eq.s32.totalorder %v942, 1
        %vm1007 = vcmp.eq.s32.totalorder %v945, 1
        %vm1008 = vcmp.eq.s32.totalorder %v948, 1
        %vm1009 = vcmp.eq.s32.totalorder %v951, 1
        %vm1010 = vcmp.eq.s32.totalorder %v954, 1
        %vm1011 = vcmp.eq.s32.totalorder %v957, 1
        %vm1012 = vcmp.eq.s32.totalorder %v960, 1
        %vm1013 = vcmp.eq.s32.totalorder %v963, 1
        %vm1014 = vcmp.eq.s32.totalorder %v966, 1
        %vm1015 = vcmp.eq.s32.totalorder %v969, 1
        %vm1016 = vcmp.eq.s32.totalorder %v972, 1
        %vm1017 = vcmp.eq.s32.totalorder %v975, 1
        %vm1018 = vcmp.eq.s32.totalorder %v978, 1
        %vm1019 = vcmp.eq.s32.totalorder %v981, 1
        %vm1020 = vcmp.eq.s32.totalorder %v984, 1
        %vm1021 = vcmp.eq.s32.totalorder %v987, 1
        %vm1022 = vcmp.eq.s32.totalorder %v990, 1
        %v1023 = vperm.slane %v605, 1
        %v1024 = vsel %vm991, %v1023, %v799
        %v1025 = vsel %vm992, %v1023, %v800
        %v1026 = vsel %vm993, %v1023, %v801
        %v1027 = vsel %vm994, %v1023, %v802
        %v1028 = vsel %vm995, %v1023, %v803
        %v1029 = vsel %vm996, %v1023, %v804
        %v1030 = vsel %vm997, %v1023, %v805
        %v1031 = vsel %vm998, %v1023, %v806
        %v1032 = vsel %vm999, %v1023, %v807
        %v1033 = vsel %vm1000, %v1023, %v808
        %v1034 = vsel %vm1001, %v1023, %v809
        %v1035 = vsel %vm1002, %v1023, %v810
        %v1036 = vsel %vm1003, %v1023, %v811
        %v1037 = vsel %vm1004, %v1023, %v812
        %v1038 = vsel %vm1005, %v1023, %v813
        %v1039 = vsel %vm1006, %v1023, %v814
        %v1040 = vsel %vm1007, %v1023, %v815
        %v1041 = vsel %vm1008, %v1023, %v816
        %v1042 = vsel %vm1009, %v1023, %v817
        %v1043 = vsel %vm1010, %v1023, %v818
        %v1044 = vsel %vm1011, %v1023, %v819
        %v1045 = vsel %vm1012, %v1023, %v820
        %v1046 = vsel %vm1013, %v1023, %v821
        %v1047 = vsel %vm1014, %v1023, %v822
        %v1048 = vsel %vm1015, %v1023, %v823
        %v1049 = vsel %vm1016, %v1023, %v824
        %v1050 = vsel %vm1017, %v1023, %v825
        %v1051 = vsel %vm1018, %v1023, %v826
        %v1052 = vsel %vm1019, %v1023, %v827
        %v1053 = vsel %vm1020, %v1023, %v828
        %v1054 = vsel %vm1021, %v1023, %v829
        %v1055 = vsel %vm1022, %v1023, %v830
        %v1056 = vadd.f32 %v541, %v1024
        %v1057 = vadd.f32 %v542, %v1025
        %v1058 = vadd.f32 %v543, %v1026
        %v1059 = vadd.f32 %v544, %v1027
        %v1060 = vadd.f32 %v545, %v1028
        %v1061 = vadd.f32 %v546, %v1029
        %v1062 = vadd.f32 %v547, %v1030
        %v1063 = vadd.f32 %v548, %v1031
        %v1064 = vadd.f32 %v549, %v1032
        %v1065 = vadd.f32 %v550, %v1033
        %v1066 = vadd.f32 %v551, %v1034
        %v1067 = vadd.f32 %v552, %v1035
        %v1068 = vadd.f32 %v553, %v1036
        %v1069 = vadd.f32 %v554, %v1037
        %v1070 = vadd.f32 %v555, %v1038
        %v1071 = vadd.f32 %v556, %v1039
        %v1072 = vadd.f32 %v557, %v1040
        %v1073 = vadd.f32 %v558, %v1041
        %v1074 = vadd.f32 %v559, %v1042
        %v1075 = vadd.f32 %v560, %v1043
        %v1076 = vadd.f32 %v561, %v1044
        %v1077 = vadd.f32 %v562, %v1045
        %v1078 = vadd.f32 %v563, %v1046
        %v1079 = vadd.f32 %v564, %v1047
        %v1080 = vadd.f32 %v565, %v1048
        %v1081 = vadd.f32 %v566, %v1049
        %v1082 = vadd.f32 %v567, %v1050
        %v1083 = vadd.f32 %v568, %v1051
        %v1084 = vadd.f32 %v569, %v1052
        %v1085 = vadd.f32 %v570, %v1053
        %v1086 = vadd.f32 %v571, %v1054
        %v1087 = vadd.f32 %v572, %v1055
        %1088 = vadd.xlane.f32.xlu0 %v1056
        %v1089 = vpop.xlane.xlu0 %1088
        %1090 = vadd.xlane.f32.xlu0 %v1057
        %v1091 = vpop.xlane.xlu0 %1090
        %1092 = vadd.xlane.f32.xlu0 %v1058
        %v1093 = vpop.xlane.xlu0 %1092
        %1094 = vadd.xlane.f32.xlu0 %v1059
        %v1095 = vpop.xlane.xlu0 %1094
        %1096 = vadd.xlane.f32.xlu0 %v1060
        %v1097 = vpop.xlane.xlu0 %1096
        %1098 = vadd.xlane.f32.xlu0 %v1061
        %v1099 = vpop.xlane.xlu0 %1098
        %1100 = vadd.xlane.f32.xlu0 %v1062
        %v1101 = vpop.xlane.xlu0 %1100
        %1102 = vadd.xlane.f32.xlu0 %v1063
        %v1103 = vpop.xlane.xlu0 %1102
        %1104 = vadd.xlane.f32.xlu0 %v1064
        %v1105 = vpop.xlane.xlu0 %1104
        %1106 = vadd.xlane.f32.xlu0 %v1065
        %v1107 = vpop.xlane.xlu0 %1106
        %1108 = vadd.xlane.f32.xlu0 %v1066
        %v1109 = vpop.xlane.xlu0 %1108
        %1110 = vadd.xlane.f32.xlu0 %v1067
        %v1111 = vpop.xlane.xlu0 %1110
        %1112 = vadd.xlane.f32.xlu0 %v1068
        %v1113 = vpop.xlane.xlu0 %1112
        %1114 = vadd.xlane.f32.xlu0 %v1069
        %v1115 = vpop.xlane.xlu0 %1114
        %1116 = vadd.xlane.f32.xlu0 %v1070
        %v1117 = vpop.xlane.xlu0 %1116
        %1118 = vadd.xlane.f32.xlu0 %v1071
        %v1119 = vpop.xlane.xlu0 %1118
        %1120 = vadd.xlane.f32.xlu0 %v1072
        %v1121 = vpop.xlane.xlu0 %1120
        %1122 = vadd.xlane.f32.xlu0 %v1073
        %v1123 = vpop.xlane.xlu0 %1122
        %1124 = vadd.xlane.f32.xlu0 %v1074
        %v1125 = vpop.xlane.xlu0 %1124
        %1126 = vadd.xlane.f32.xlu0 %v1075
        %v1127 = vpop.xlane.xlu0 %1126
        %1128 = vadd.xlane.f32.xlu0 %v1076
        %v1129 = vpop.xlane.xlu0 %1128
        %1130 = vadd.xlane.f32.xlu0 %v1077
        %v1131 = vpop.xlane.xlu0 %1130
        %1132 = vadd.xlane.f32.xlu0 %v1078
        %v1133 = vpop.xlane.xlu0 %1132
        %1134 = vadd.xlane.f32.xlu0 %v1079
        %v1135 = vpop.xlane.xlu0 %1134
        %1136 = vadd.xlane.f32.xlu0 %v1080
        %v1137 = vpop.xlane.xlu0 %1136
        %1138 = vadd.xlane.f32.xlu0 %v1081
        %v1139 = vpop.xlane.xlu0 %1138
        %1140 = vadd.xlane.f32.xlu0 %v1082
        %v1141 = vpop.xlane.xlu0 %1140
        %1142 = vadd.xlane.f32.xlu0 %v1083
        %v1143 = vpop.xlane.xlu0 %1142
        %1144 = vadd.xlane.f32.xlu0 %v1084
        %v1145 = vpop.xlane.xlu0 %1144
        %1146 = vadd.xlane.f32.xlu0 %v1085
        %v1147 = vpop.xlane.xlu0 %1146
        %1148 = vadd.xlane.f32.xlu0 %v1086
        %v1149 = vpop.xlane.xlu0 %1148
        %1150 = vadd.xlane.f32.xlu0 %v1087
        %v1151 = vpop.xlane.xlu0 %1150
        %v1152 = vmul.f32 %v1056, %v1056
        %v1153 = vmul.f32 %v1057, %v1057
        %v1154 = vmul.f32 %v1058, %v1058
        %v1155 = vmul.f32 %v1059, %v1059
        %v1156 = vmul.f32 %v1060, %v1060
        %v1157 = vmul.f32 %v1061, %v1061
        %v1158 = vmul.f32 %v1062, %v1062
        %v1159 = vmul.f32 %v1063, %v1063
        %v1160 = vmul.f32 %v1064, %v1064
        %v1161 = vmul.f32 %v1065, %v1065
        %v1162 = vmul.f32 %v1066, %v1066
        %v1163 = vmul.f32 %v1067, %v1067
        %v1164 = vmul.f32 %v1068, %v1068
        %v1165 = vmul.f32 %v1069, %v1069
        %v1166 = vmul.f32 %v1070, %v1070
        %v1167 = vmul.f32 %v1071, %v1071
        %v1168 = vmul.f32 %v1072, %v1072
        %v1169 = vmul.f32 %v1073, %v1073
        %v1170 = vmul.f32 %v1074, %v1074
        %v1171 = vmul.f32 %v1075, %v1075
        %v1172 = vmul.f32 %v1076, %v1076
        %v1173 = vmul.f32 %v1077, %v1077
        %v1174 = vmul.f32 %v1078, %v1078
        %v1175 = vmul.f32 %v1079, %v1079
        %v1176 = vmul.f32 %v1080, %v1080
        %v1177 = vmul.f32 %v1081, %v1081
        %v1178 = vmul.f32 %v1082, %v1082
        %v1179 = vmul.f32 %v1083, %v1083
        %v1180 = vmul.f32 %v1084, %v1084
        %v1181 = vmul.f32 %v1085, %v1085
        %v1182 = vmul.f32 %v1086, %v1086
        %v1183 = vmul.f32 %v1087, %v1087
        %1184 = vadd.xlane.f32.xlu0 %v1152
        %v1185 = vpop.xlane.xlu0 %1184
        %1186 = vadd.xlane.f32.xlu0 %v1153
        %v1187 = vpop.xlane.xlu0 %1186
        %1188 = vadd.xlane.f32.xlu0 %v1154
        %v1189 = vpop.xlane.xlu0 %1188
        %1190 = vadd.xlane.f32.xlu0 %v1155
        %v1191 = vpop.xlane.xlu0 %1190
        %1192 = vadd.xlane.f32.xlu0 %v1156
        %v1193 = vpop.xlane.xlu0 %1192
        %1194 = vadd.xlane.f32.xlu0 %v1157
        %v1195 = vpop.xlane.xlu0 %1194
        %1196 = vadd.xlane.f32.xlu0 %v1158
        %v1197 = vpop.xlane.xlu0 %1196
        %1198 = vadd.xlane.f32.xlu0 %v1159
        %v1199 = vpop.xlane.xlu0 %1198
        %1200 = vadd.xlane.f32.xlu0 %v1160
        %v1201 = vpop.xlane.xlu0 %1200
        %1202 = vadd.xlane.f32.xlu0 %v1161
        %v1203 = vpop.xlane.xlu0 %1202
        %1204 = vadd.xlane.f32.xlu0 %v1162
        %v1205 = vpop.xlane.xlu0 %1204
        %1206 = vadd.xlane.f32.xlu0 %v1163
        %v1207 = vpop.xlane.xlu0 %1206
        %1208 = vadd.xlane.f32.xlu0 %v1164
        %v1209 = vpop.xlane.xlu0 %1208
        %1210 = vadd.xlane.f32.xlu0 %v1165
        %v1211 = vpop.xlane.xlu0 %1210
        %1212 = vadd.xlane.f32.xlu0 %v1166
        %v1213 = vpop.xlane.xlu0 %1212
        %1214 = vadd.xlane.f32.xlu0 %v1167
        %v1215 = vpop.xlane.xlu0 %1214
        %1216 = vadd.xlane.f32.xlu0 %v1168
        %v1217 = vpop.xlane.xlu0 %1216
        %1218 = vadd.xlane.f32.xlu0 %v1169
        %v1219 = vpop.xlane.xlu0 %1218
        %1220 = vadd.xlane.f32.xlu0 %v1170
        %v1221 = vpop.xlane.xlu0 %1220
        %1222 = vadd.xlane.f32.xlu0 %v1171
        %v1223 = vpop.xlane.xlu0 %1222
        %1224 = vadd.xlane.f32.xlu0 %v1172
        %v1225 = vpop.xlane.xlu0 %1224
        %1226 = vadd.xlane.f32.xlu0 %v1173
        %v1227 = vpop.xlane.xlu0 %1226
        %1228 = vadd.xlane.f32.xlu0 %v1174
        %v1229 = vpop.xlane.xlu0 %1228
        %1230 = vadd.xlane.f32.xlu0 %v1175
        %v1231 = vpop.xlane.xlu0 %1230
        %1232 = vadd.xlane.f32.xlu0 %v1176
        %v1233 = vpop.xlane.xlu0 %1232
        %1234 = vadd.xlane.f32.xlu0 %v1177
        %v1235 = vpop.xlane.xlu0 %1234
        %1236 = vadd.xlane.f32.xlu0 %v1178
        %v1237 = vpop.xlane.xlu0 %1236
        %1238 = vadd.xlane.f32.xlu0 %v1179
        %v1239 = vpop.xlane.xlu0 %1238
        %1240 = vadd.xlane.f32.xlu0 %v1180
        %v1241 = vpop.xlane.xlu0 %1240
        %1242 = vadd.xlane.f32.xlu0 %v1181
        %v1243 = vpop.xlane.xlu0 %1242
        %1244 = vadd.xlane.f32.xlu0 %v1182
        %v1245 = vpop.xlane.xlu0 %1244
        %1246 = vadd.xlane.f32.xlu0 %v1183
        %v1247 = vpop.xlane.xlu0 %1246
        %v1248 = vmul.f32 %v1089, 0.0078125
        %v1249 = vmul.f32 %v1091, 0.0078125
        %v1250 = vmul.f32 %v1093, 0.0078125
        %v1251 = vmul.f32 %v1095, 0.0078125
        %v1252 = vmul.f32 %v1097, 0.0078125
        %v1253 = vmul.f32 %v1099, 0.0078125
        %v1254 = vmul.f32 %v1101, 0.0078125
        %v1255 = vmul.f32 %v1103, 0.0078125
        %v1256 = vmul.f32 %v1105, 0.0078125
        %v1257 = vmul.f32 %v1107, 0.0078125
        %v1258 = vmul.f32 %v1109, 0.0078125
        %v1259 = vmul.f32 %v1111, 0.0078125
        %v1260 = vmul.f32 %v1113, 0.0078125
        %v1261 = vmul.f32 %v1115, 0.0078125
        %v1262 = vmul.f32 %v1117, 0.0078125
        %v1263 = vmul.f32 %v1119, 0.0078125
        %v1264 = vmul.f32 %v1121, 0.0078125
        %v1265 = vmul.f32 %v1123, 0.0078125
        %v1266 = vmul.f32 %v1125, 0.0078125
        %v1267 = vmul.f32 %v1127, 0.0078125
        %v1268 = vmul.f32 %v1129, 0.0078125
        %v1269 = vmul.f32 %v1131, 0.0078125
        %v1270 = vmul.f32 %v1133, 0.0078125
        %v1271 = vmul.f32 %v1135, 0.0078125
        %v1272 = vmul.f32 %v1137, 0.0078125
        %v1273 = vmul.f32 %v1139, 0.0078125
        %v1274 = vmul.f32 %v1141, 0.0078125
        %v1275 = vmul.f32 %v1143, 0.0078125
        %v1276 = vmul.f32 %v1145, 0.0078125
        %v1277 = vmul.f32 %v1147, 0.0078125
        %v1278 = vmul.f32 %v1149, 0.0078125
        %v1279 = vmul.f32 %v1151, 0.0078125
        %v1280 = vmul.f32 %v1185, 0.0078125
        %v1281 = vmul.f32 %v1187, 0.0078125
        %v1282 = vmul.f32 %v1189, 0.0078125
        %v1283 = vmul.f32 %v1191, 0.0078125
        %v1284 = vmul.f32 %v1193, 0.0078125
        %v1285 = vmul.f32 %v1195, 0.0078125
        %v1286 = vmul.f32 %v1197, 0.0078125
        %v1287 = vmul.f32 %v1199, 0.0078125
        %v1288 = vmul.f32 %v1201, 0.0078125
        %v1289 = vmul.f32 %v1203, 0.0078125
        %v1290 = vmul.f32 %v1205, 0.0078125
        %v1291 = vmul.f32 %v1207, 0.0078125
        %v1292 = vmul.f32 %v1209, 0.0078125
        %v1293 = vmul.f32 %v1211, 0.0078125
        %v1294 = vmul.f32 %v1213, 0.0078125
        %v1295 = vmul.f32 %v1215, 0.0078125
        %v1296 = vmul.f32 %v1217, 0.0078125
        %v1297 = vmul.f32 %v1219, 0.0078125
        %v1298 = vmul.f32 %v1221, 0.0078125
        %v1299 = vmul.f32 %v1223, 0.0078125
        %v1300 = vmul.f32 %v1225, 0.0078125
        %v1301 = vmul.f32 %v1227, 0.0078125
        %v1302 = vmul.f32 %v1229, 0.0078125
        %v1303 = vmul.f32 %v1231, 0.0078125
        %v1304 = vmul.f32 %v1233, 0.0078125
        %v1305 = vmul.f32 %v1235, 0.0078125
        %v1306 = vmul.f32 %v1237, 0.0078125
        %v1307 = vmul.f32 %v1239, 0.0078125
        %v1308 = vmul.f32 %v1241, 0.0078125
        %v1309 = vmul.f32 %v1243, 0.0078125
        %v1310 = vmul.f32 %v1245, 0.0078125
        %v1311 = vmul.f32 %v1247, 0.0078125
        %v1312 = vmul.f32 %v1248, %v1248
        %v1313 = vmul.f32 %v1249, %v1249
        %v1314 = vmul.f32 %v1250, %v1250
        %v1315 = vmul.f32 %v1251, %v1251
        %v1316 = vmul.f32 %v1252, %v1252
        %v1317 = vmul.f32 %v1253, %v1253
        %v1318 = vmul.f32 %v1254, %v1254
        %v1319 = vmul.f32 %v1255, %v1255
        %v1320 = vmul.f32 %v1256, %v1256
        %v1321 = vmul.f32 %v1257, %v1257
        %v1322 = vmul.f32 %v1258, %v1258
        %v1323 = vmul.f32 %v1259, %v1259
        %v1324 = vmul.f32 %v1260, %v1260
        %v1325 = vmul.f32 %v1261, %v1261
        %v1326 = vmul.f32 %v1262, %v1262
        %v1327 = vmul.f32 %v1263, %v1263
        %v1328 = vmul.f32 %v1264, %v1264
        %v1329 = vmul.f32 %v1265, %v1265
        %v1330 = vmul.f32 %v1266, %v1266
        %v1331 = vmul.f32 %v1267, %v1267
        %v1332 = vmul.f32 %v1268, %v1268
        %v1333 = vmul.f32 %v1269, %v1269
        %v1334 = vmul.f32 %v1270, %v1270
        %v1335 = vmul.f32 %v1271, %v1271
        %v1336 = vmul.f32 %v1272, %v1272
        %v1337 = vmul.f32 %v1273, %v1273
        %v1338 = vmul.f32 %v1274, %v1274
        %v1339 = vmul.f32 %v1275, %v1275
        %v1340 = vmul.f32 %v1276, %v1276
        %v1341 = vmul.f32 %v1277, %v1277
        %v1342 = vmul.f32 %v1278, %v1278
        %v1343 = vmul.f32 %v1279, %v1279
        %v1344 = vsub.f32 %v1280, %v1312
        %v1345 = vsub.f32 %v1281, %v1313
        %v1346 = vsub.f32 %v1282, %v1314
        %v1347 = vsub.f32 %v1283, %v1315
        %v1348 = vsub.f32 %v1284, %v1316
        %v1349 = vsub.f32 %v1285, %v1317
        %v1350 = vsub.f32 %v1286, %v1318
        %v1351 = vsub.f32 %v1287, %v1319
        %v1352 = vsub.f32 %v1288, %v1320
        %v1353 = vsub.f32 %v1289, %v1321
        %v1354 = vsub.f32 %v1290, %v1322
        %v1355 = vsub.f32 %v1291, %v1323
        %v1356 = vsub.f32 %v1292, %v1324
        %v1357 = vsub.f32 %v1293, %v1325
        %v1358 = vsub.f32 %v1294, %v1326
        %v1359 = vsub.f32 %v1295, %v1327
        %v1360 = vsub.f32 %v1296, %v1328
        %v1361 = vsub.f32 %v1297, %v1329
        %v1362 = vsub.f32 %v1298, %v1330
        %v1363 = vsub.f32 %v1299, %v1331
        %v1364 = vsub.f32 %v1300, %v1332
        %v1365 = vsub.f32 %v1301, %v1333
        %v1366 = vsub.f32 %v1302, %v1334
        %v1367 = vsub.f32 %v1303, %v1335
        %v1368 = vsub.f32 %v1304, %v1336
        %v1369 = vsub.f32 %v1305, %v1337
        %v1370 = vsub.f32 %v1306, %v1338
        %v1371 = vsub.f32 %v1307, %v1339
        %v1372 = vsub.f32 %v1308, %v1340
        %v1373 = vsub.f32 %v1309, %v1341
        %v1374 = vsub.f32 %v1310, %v1342
        %v1375 = vsub.f32 %v1311, %v1343
        %v1376 = vsub.f32 %v1056, %v1248
        %v1377 = vsub.f32 %v1057, %v1249
        %v1378 = vsub.f32 %v1058, %v1250
        %v1379 = vsub.f32 %v1059, %v1251
        %v1380 = vsub.f32 %v1060, %v1252
        %v1381 = vsub.f32 %v1061, %v1253
        %v1382 = vsub.f32 %v1062, %v1254
        %v1383 = vsub.f32 %v1063, %v1255
        %v1384 = vsub.f32 %v1064, %v1256
        %v1385 = vsub.f32 %v1065, %v1257
        %v1386 = vsub.f32 %v1066, %v1258
        %v1387 = vsub.f32 %v1067, %v1259
        %v1388 = vsub.f32 %v1068, %v1260
        %v1389 = vsub.f32 %v1069, %v1261
        %v1390 = vsub.f32 %v1070, %v1262
        %v1391 = vsub.f32 %v1071, %v1263
        %v1392 = vsub.f32 %v1072, %v1264
        %v1393 = vsub.f32 %v1073, %v1265
        %v1394 = vsub.f32 %v1074, %v1266
        %v1395 = vsub.f32 %v1075, %v1267
        %v1396 = vsub.f32 %v1076, %v1268
        %v1397 = vsub.f32 %v1077, %v1269
        %v1398 = vsub.f32 %v1078, %v1270
        %v1399 = vsub.f32 %v1079, %v1271
        %v1400 = vsub.f32 %v1080, %v1272
        %v1401 = vsub.f32 %v1081, %v1273
        %v1402 = vsub.f32 %v1082, %v1274
        %v1403 = vsub.f32 %v1083, %v1275
        %v1404 = vsub.f32 %v1084, %v1276
        %v1405 = vsub.f32 %v1085, %v1277
        %v1406 = vsub.f32 %v1086, %v1278
        %v1407 = vsub.f32 %v1087, %v1279
        %v1408 = vadd.f32 %v1344, 1e-12
        %v1409 = vadd.f32 %v1345, 1e-12
        %v1410 = vadd.f32 %v1346, 1e-12
        %v1411 = vadd.f32 %v1347, 1e-12
        %v1412 = vadd.f32 %v1348, 1e-12
        %v1413 = vadd.f32 %v1349, 1e-12
        %v1414 = vadd.f32 %v1350, 1e-12
        %v1415 = vadd.f32 %v1351, 1e-12
        %v1416 = vadd.f32 %v1352, 1e-12
        %v1417 = vadd.f32 %v1353, 1e-12
        %v1418 = vadd.f32 %v1354, 1e-12
        %v1419 = vadd.f32 %v1355, 1e-12
        %v1420 = vadd.f32 %v1356, 1e-12
        %v1421 = vadd.f32 %v1357, 1e-12
        %v1422 = vadd.f32 %v1358, 1e-12
        %v1423 = vadd.f32 %v1359, 1e-12
        %v1424 = vadd.f32 %v1360, 1e-12
        %v1425 = vadd.f32 %v1361, 1e-12
        %v1426 = vadd.f32 %v1362, 1e-12
        %v1427 = vadd.f32 %v1363, 1e-12
        %v1428 = vadd.f32 %v1364, 1e-12
        %v1429 = vadd.f32 %v1365, 1e-12
        %v1430 = vadd.f32 %v1366, 1e-12
        %v1431 = vadd.f32 %v1367, 1e-12
        %v1432 = vadd.f32 %v1368, 1e-12
        %v1433 = vadd.f32 %v1369, 1e-12
        %v1434 = vadd.f32 %v1370, 1e-12
        %v1435 = vadd.f32 %v1371, 1e-12
        %v1436 = vadd.f32 %v1372, 1e-12
        %v1437 = vadd.f32 %v1373, 1e-12
        %v1438 = vadd.f32 %v1374, 1e-12
        %v1439 = vadd.f32 %v1375, 1e-12
        %v1440 = vrsqrt.pop %v1408
        %v1441 = vmul.f32 %v1440, %v1408
        %v1442 = vmul.f32 %v1441, %v1440
        %v1443 = vmul.f32 0.5, %v1442
        %v1444 = vsub.f32 1.5, %v1443
        %v1445 = vmul.f32 %v1440, %v1444
        %vm1446 = vweird.f32 %v1408
        %vm1447 = vweird.f32 %v1440
        %vm1448 = vmor %vm1446, %vm1447
        %v1449 = vsel %vm1448, %v1440, %v1445
        %v1450 = vrsqrt.pop %v1409
        %v1451 = vmul.f32 %v1450, %v1409
        %v1452 = vmul.f32 %v1451, %v1450
        %v1453 = vmul.f32 0.5, %v1452
        %v1454 = vsub.f32 1.5, %v1453
        %v1455 = vmul.f32 %v1450, %v1454
        %vm1456 = vweird.f32 %v1409
        %vm1457 = vweird.f32 %v1450
        %vm1458 = vmor %vm1456, %vm1457
        %v1459 = vsel %vm1458, %v1450, %v1455
        %v1460 = vrsqrt.pop %v1410
        %v1461 = vmul.f32 %v1460, %v1410
        %v1462 = vmul.f32 %v1461, %v1460
        %v1463 = vmul.f32 0.5, %v1462
        %v1464 = vsub.f32 1.5, %v1463
        %v1465 = vmul.f32 %v1460, %v1464
        %vm1466 = vweird.f32 %v1410
        %vm1467 = vweird.f32 %v1460
        %vm1468 = vmor %vm1466, %vm1467
        %v1469 = vsel %vm1468, %v1460, %v1465
        %v1470 = vrsqrt.pop %v1411
        %v1471 = vmul.f32 %v1470, %v1411
        %v1472 = vmul.f32 %v1471, %v1470
        %v1473 = vmul.f32 0.5, %v1472
        %v1474 = vsub.f32 1.5, %v1473
        %v1475 = vmul.f32 %v1470, %v1474
        %vm1476 = vweird.f32 %v1411
        %vm1477 = vweird.f32 %v1470
        %vm1478 = vmor %vm1476, %vm1477
        %v1479 = vsel %vm1478, %v1470, %v1475
        %v1480 = vrsqrt.pop %v1412
        %v1481 = vmul.f32 %v1480, %v1412
        %v1482 = vmul.f32 %v1481, %v1480
        %v1483 = vmul.f32 0.5, %v1482
        %v1484 = vsub.f32 1.5, %v1483
        %v1485 = vmul.f32 %v1480, %v1484
        %vm1486 = vweird.f32 %v1412
        %vm1487 = vweird.f32 %v1480
        %vm1488 = vmor %vm1486, %vm1487
        %v1489 = vsel %vm1488, %v1480, %v1485
        %v1490 = vrsqrt.pop %v1413
        %v1491 = vmul.f32 %v1490, %v1413
        %v1492 = vmul.f32 %v1491, %v1490
        %v1493 = vmul.f32 0.5, %v1492
        %v1494 = vsub.f32 1.5, %v1493
        %v1495 = vmul.f32 %v1490, %v1494
        %vm1496 = vweird.f32 %v1413
        %vm1497 = vweird.f32 %v1490
        %vm1498 = vmor %vm1496, %vm1497
        %v1499 = vsel %vm1498, %v1490, %v1495
        %v1500 = vrsqrt.pop %v1414
        %v1501 = vmul.f32 %v1500, %v1414
        %v1502 = vmul.f32 %v1501, %v1500
        %v1503 = vmul.f32 0.5, %v1502
        %v1504 = vsub.f32 1.5, %v1503
        %v1505 = vmul.f32 %v1500, %v1504
        %vm1506 = vweird.f32 %v1414
        %vm1507 = vweird.f32 %v1500
        %vm1508 = vmor %vm1506, %vm1507
        %v1509 = vsel %vm1508, %v1500, %v1505
        %v1510 = vrsqrt.pop %v1415
        %v1511 = vmul.f32 %v1510, %v1415
        %v1512 = vmul.f32 %v1511, %v1510
        %v1513 = vmul.f32 0.5, %v1512
        %v1514 = vsub.f32 1.5, %v1513
        %v1515 = vmul.f32 %v1510, %v1514
        %vm1516 = vweird.f32 %v1415
        %vm1517 = vweird.f32 %v1510
        %vm1518 = vmor %vm1516, %vm1517
        %v1519 = vsel %vm1518, %v1510, %v1515
        %v1520 = vrsqrt.pop %v1416
        %v1521 = vmul.f32 %v1520, %v1416
        %v1522 = vmul.f32 %v1521, %v1520
        %v1523 = vmul.f32 0.5, %v1522
        %v1524 = vsub.f32 1.5, %v1523
        %v1525 = vmul.f32 %v1520, %v1524
        %vm1526 = vweird.f32 %v1416
        %vm1527 = vweird.f32 %v1520
        %vm1528 = vmor %vm1526, %vm1527
        %v1529 = vsel %vm1528, %v1520, %v1525
        %v1530 = vrsqrt.pop %v1417
        %v1531 = vmul.f32 %v1530, %v1417
        %v1532 = vmul.f32 %v1531, %v1530
        %v1533 = vmul.f32 0.5, %v1532
        %v1534 = vsub.f32 1.5, %v1533
        %v1535 = vmul.f32 %v1530, %v1534
        %vm1536 = vweird.f32 %v1417
        %vm1537 = vweird.f32 %v1530
        %vm1538 = vmor %vm1536, %vm1537
        %v1539 = vsel %vm1538, %v1530, %v1535
        %v1540 = vrsqrt.pop %v1418
        %v1541 = vmul.f32 %v1540, %v1418
        %v1542 = vmul.f32 %v1541, %v1540
        %v1543 = vmul.f32 0.5, %v1542
        %v1544 = vsub.f32 1.5, %v1543
        %v1545 = vmul.f32 %v1540, %v1544
        %vm1546 = vweird.f32 %v1418
        %vm1547 = vweird.f32 %v1540
        %vm1548 = vmor %vm1546, %vm1547
        %v1549 = vsel %vm1548, %v1540, %v1545
        %v1550 = vrsqrt.pop %v1419
        %v1551 = vmul.f32 %v1550, %v1419
        %v1552 = vmul.f32 %v1551, %v1550
        %v1553 = vmul.f32 0.5, %v1552
        %v1554 = vsub.f32 1.5, %v1553
        %v1555 = vmul.f32 %v1550, %v1554
        %vm1556 = vweird.f32 %v1419
        %vm1557 = vweird.f32 %v1550
        %vm1558 = vmor %vm1556, %vm1557
        %v1559 = vsel %vm1558, %v1550, %v1555
        %v1560 = vrsqrt.pop %v1420
        %v1561 = vmul.f32 %v1560, %v1420
        %v1562 = vmul.f32 %v1561, %v1560
        %v1563 = vmul.f32 0.5, %v1562
        %v1564 = vsub.f32 1.5, %v1563
        %v1565 = vmul.f32 %v1560, %v1564
        %vm1566 = vweird.f32 %v1420
        %vm1567 = vweird.f32 %v1560
        %vm1568 = vmor %vm1566, %vm1567
        %v1569 = vsel %vm1568, %v1560, %v1565
        %v1570 = vrsqrt.pop %v1421
        %v1571 = vmul.f32 %v1570, %v1421
        %v1572 = vmul.f32 %v1571, %v1570
        %v1573 = vmul.f32 0.5, %v1572
        %v1574 = vsub.f32 1.5, %v1573
        %v1575 = vmul.f32 %v1570, %v1574
        %vm1576 = vweird.f32 %v1421
        %vm1577 = vweird.f32 %v1570
        %vm1578 = vmor %vm1576, %vm1577
        %v1579 = vsel %vm1578, %v1570, %v1575
        %v1580 = vrsqrt.pop %v1422
        %v1581 = vmul.f32 %v1580, %v1422
        %v1582 = vmul.f32 %v1581, %v1580
        %v1583 = vmul.f32 0.5, %v1582
        %v1584 = vsub.f32 1.5, %v1583
        %v1585 = vmul.f32 %v1580, %v1584
        %vm1586 = vweird.f32 %v1422
        %vm1587 = vweird.f32 %v1580
        %vm1588 = vmor %vm1586, %vm1587
        %v1589 = vsel %vm1588, %v1580, %v1585
        %v1590 = vrsqrt.pop %v1423
        %v1591 = vmul.f32 %v1590, %v1423
        %v1592 = vmul.f32 %v1591, %v1590
        %v1593 = vmul.f32 0.5, %v1592
        %v1594 = vsub.f32 1.5, %v1593
        %v1595 = vmul.f32 %v1590, %v1594
        %vm1596 = vweird.f32 %v1423
        %vm1597 = vweird.f32 %v1590
        %vm1598 = vmor %vm1596, %vm1597
        %v1599 = vsel %vm1598, %v1590, %v1595
        %v1600 = vrsqrt.pop %v1424
        %v1601 = vmul.f32 %v1600, %v1424
        %v1602 = vmul.f32 %v1601, %v1600
        %v1603 = vmul.f32 0.5, %v1602
        %v1604 = vsub.f32 1.5, %v1603
        %v1605 = vmul.f32 %v1600, %v1604
        %vm1606 = vweird.f32 %v1424
        %vm1607 = vweird.f32 %v1600
        %vm1608 = vmor %vm1606, %vm1607
        %v1609 = vsel %vm1608, %v1600, %v1605
        %v1610 = vrsqrt.pop %v1425
        %v1611 = vmul.f32 %v1610, %v1425
        %v1612 = vmul.f32 %v1611, %v1610
        %v1613 = vmul.f32 0.5, %v1612
        %v1614 = vsub.f32 1.5, %v1613
        %v1615 = vmul.f32 %v1610, %v1614
        %vm1616 = vweird.f32 %v1425
        %vm1617 = vweird.f32 %v1610
        %vm1618 = vmor %vm1616, %vm1617
        %v1619 = vsel %vm1618, %v1610, %v1615
        %v1620 = vrsqrt.pop %v1426
        %v1621 = vmul.f32 %v1620, %v1426
        %v1622 = vmul.f32 %v1621, %v1620
        %v1623 = vmul.f32 0.5, %v1622
        %v1624 = vsub.f32 1.5, %v1623
        %v1625 = vmul.f32 %v1620, %v1624
        %vm1626 = vweird.f32 %v1426
        %vm1627 = vweird.f32 %v1620
        %vm1628 = vmor %vm1626, %vm1627
        %v1629 = vsel %vm1628, %v1620, %v1625
        %v1630 = vrsqrt.pop %v1427
        %v1631 = vmul.f32 %v1630, %v1427
        %v1632 = vmul.f32 %v1631, %v1630
        %v1633 = vmul.f32 0.5, %v1632
        %v1634 = vsub.f32 1.5, %v1633
        %v1635 = vmul.f32 %v1630, %v1634
        %vm1636 = vweird.f32 %v1427
        %vm1637 = vweird.f32 %v1630
        %vm1638 = vmor %vm1636, %vm1637
        %v1639 = vsel %vm1638, %v1630, %v1635
        %v1640 = vrsqrt.pop %v1428
        %v1641 = vmul.f32 %v1640, %v1428
        %v1642 = vmul.f32 %v1641, %v1640
        %v1643 = vmul.f32 0.5, %v1642
        %v1644 = vsub.f32 1.5, %v1643
        %v1645 = vmul.f32 %v1640, %v1644
        %vm1646 = vweird.f32 %v1428
        %vm1647 = vweird.f32 %v1640
        %vm1648 = vmor %vm1646, %vm1647
        %v1649 = vsel %vm1648, %v1640, %v1645
        %v1650 = vrsqrt.pop %v1429
        %v1651 = vmul.f32 %v1650, %v1429
        %v1652 = vmul.f32 %v1651, %v1650
        %v1653 = vmul.f32 0.5, %v1652
        %v1654 = vsub.f32 1.5, %v1653
        %v1655 = vmul.f32 %v1650, %v1654
        %vm1656 = vweird.f32 %v1429
        %vm1657 = vweird.f32 %v1650
        %vm1658 = vmor %vm1656, %vm1657
        %v1659 = vsel %vm1658, %v1650, %v1655
        %v1660 = vrsqrt.pop %v1430
        %v1661 = vmul.f32 %v1660, %v1430
        %v1662 = vmul.f32 %v1661, %v1660
        %v1663 = vmul.f32 0.5, %v1662
        %v1664 = vsub.f32 1.5, %v1663
        %v1665 = vmul.f32 %v1660, %v1664
        %vm1666 = vweird.f32 %v1430
        %vm1667 = vweird.f32 %v1660
        %vm1668 = vmor %vm1666, %vm1667
        %v1669 = vsel %vm1668, %v1660, %v1665
        %v1670 = vrsqrt.pop %v1431
        %v1671 = vmul.f32 %v1670, %v1431
        %v1672 = vmul.f32 %v1671, %v1670
        %v1673 = vmul.f32 0.5, %v1672
        %v1674 = vsub.f32 1.5, %v1673
        %v1675 = vmul.f32 %v1670, %v1674
        %vm1676 = vweird.f32 %v1431
        %vm1677 = vweird.f32 %v1670
        %vm1678 = vmor %vm1676, %vm1677
        %v1679 = vsel %vm1678, %v1670, %v1675
        %v1680 = vrsqrt.pop %v1432
        %v1681 = vmul.f32 %v1680, %v1432
        %v1682 = vmul.f32 %v1681, %v1680
        %v1683 = vmul.f32 0.5, %v1682
        %v1684 = vsub.f32 1.5, %v1683
        %v1685 = vmul.f32 %v1680, %v1684
        %vm1686 = vweird.f32 %v1432
        %vm1687 = vweird.f32 %v1680
        %vm1688 = vmor %vm1686, %vm1687
        %v1689 = vsel %vm1688, %v1680, %v1685
        %v1690 = vrsqrt.pop %v1433
        %v1691 = vmul.f32 %v1690, %v1433
        %v1692 = vmul.f32 %v1691, %v1690
        %v1693 = vmul.f32 0.5, %v1692
        %v1694 = vsub.f32 1.5, %v1693
        %v1695 = vmul.f32 %v1690, %v1694
        %vm1696 = vweird.f32 %v1433
        %vm1697 = vweird.f32 %v1690
        %vm1698 = vmor %vm1696, %vm1697
        %v1699 = vsel %vm1698, %v1690, %v1695
        %v1700 = vrsqrt.pop %v1434
        %v1701 = vmul.f32 %v1700, %v1434
        %v1702 = vmul.f32 %v1701, %v1700
        %v1703 = vmul.f32 0.5, %v1702
        %v1704 = vsub.f32 1.5, %v1703
        %v1705 = vmul.f32 %v1700, %v1704
        %vm1706 = vweird.f32 %v1434
        %vm1707 = vweird.f32 %v1700
        %vm1708 = vmor %vm1706, %vm1707
        %v1709 = vsel %vm1708, %v1700, %v1705
        %v1710 = vrsqrt.pop %v1435
        %v1711 = vmul.f32 %v1710, %v1435
        %v1712 = vmul.f32 %v1711, %v1710
        %v1713 = vmul.f32 0.5, %v1712
        %v1714 = vsub.f32 1.5, %v1713
        %v1715 = vmul.f32 %v1710, %v1714
        %vm1716 = vweird.f32 %v1435
        %vm1717 = vweird.f32 %v1710
        %vm1718 = vmor %vm1716, %vm1717
        %v1719 = vsel %vm1718, %v1710, %v1715
        %v1720 = vrsqrt.pop %v1436
        %v1721 = vmul.f32 %v1720, %v1436
        %v1722 = vmul.f32 %v1721, %v1720
        %v1723 = vmul.f32 0.5, %v1722
        %v1724 = vsub.f32 1.5, %v1723
        %v1725 = vmul.f32 %v1720, %v1724
        %vm1726 = vweird.f32 %v1436
        %vm1727 = vweird.f32 %v1720
        %vm1728 = vmor %vm1726, %vm1727
        %v1729 = vsel %vm1728, %v1720, %v1725
        %v1730 = vrsqrt.pop %v1437
        %v1731 = vmul.f32 %v1730, %v1437
        %v1732 = vmul.f32 %v1731, %v1730
        %v1733 = vmul.f32 0.5, %v1732
        %v1734 = vsub.f32 1.5, %v1733
        %v1735 = vmul.f32 %v1730, %v1734
        %vm1736 = vweird.f32 %v1437
        %vm1737 = vweird.f32 %v1730
        %vm1738 = vmor %vm1736, %vm1737
        %v1739 = vsel %vm1738, %v1730, %v1735
        %v1740 = vrsqrt.pop %v1438
        %v1741 = vmul.f32 %v1740, %v1438
        %v1742 = vmul.f32 %v1741, %v1740
        %v1743 = vmul.f32 0.5, %v1742
        %v1744 = vsub.f32 1.5, %v1743
        %v1745 = vmul.f32 %v1740, %v1744
        %vm1746 = vweird.f32 %v1438
        %vm1747 = vweird.f32 %v1740
        %vm1748 = vmor %vm1746, %vm1747
        %v1749 = vsel %vm1748, %v1740, %v1745
        %v1750 = vrsqrt.pop %v1439
        %v1751 = vmul.f32 %v1750, %v1439
        %v1752 = vmul.f32 %v1751, %v1750
        %v1753 = vmul.f32 0.5, %v1752
        %v1754 = vsub.f32 1.5, %v1753
        %v1755 = vmul.f32 %v1750, %v1754
        %vm1756 = vweird.f32 %v1439
        %vm1757 = vweird.f32 %v1750
        %vm1758 = vmor %vm1756, %vm1757
        %v1759 = vsel %vm1758, %v1750, %v1755
        %v1760 = vmul.f32 %v1376, %v1449
        %v1761 = vmul.f32 %v1377, %v1459
        %v1762 = vmul.f32 %v1378, %v1469
        %v1763 = vmul.f32 %v1379, %v1479
        %v1764 = vmul.f32 %v1380, %v1489
        %v1765 = vmul.f32 %v1381, %v1499
        %v1766 = vmul.f32 %v1382, %v1509
        %v1767 = vmul.f32 %v1383, %v1519
        %v1768 = vmul.f32 %v1384, %v1529
        %v1769 = vmul.f32 %v1385, %v1539
        %v1770 = vmul.f32 %v1386, %v1549
        %v1771 = vmul.f32 %v1387, %v1559
        %v1772 = vmul.f32 %v1388, %v1569
        %v1773 = vmul.f32 %v1389, %v1579
        %v1774 = vmul.f32 %v1390, %v1589
        %v1775 = vmul.f32 %v1391, %v1599
        %v1776 = vmul.f32 %v1392, %v1609
        %v1777 = vmul.f32 %v1393, %v1619
        %v1778 = vmul.f32 %v1394, %v1629
        %v1779 = vmul.f32 %v1395, %v1639
        %v1780 = vmul.f32 %v1396, %v1649
        %v1781 = vmul.f32 %v1397, %v1659
        %v1782 = vmul.f32 %v1398, %v1669
        %v1783 = vmul.f32 %v1399, %v1679
        %v1784 = vmul.f32 %v1400, %v1689
        %v1785 = vmul.f32 %v1401, %v1699
        %v1786 = vmul.f32 %v1402, %v1709
        %v1787 = vmul.f32 %v1403, %v1719
        %v1788 = vmul.f32 %v1404, %v1729
        %v1789 = vmul.f32 %v1405, %v1739
        %v1790 = vmul.f32 %v1406, %v1749
        %v1791 = vmul.f32 %v1407, %v1759
        %v1792 = vld [vmem:[%s6] sm:$0x1]
        %v1794 = vperm.slane %v1792, 0
        %v1796 = vmul.f32 %v1760, %v1794
        %v1797 = vmul.f32 %v1761, %v1794
        %v1798 = vmul.f32 %v1762, %v1794
        %v1799 = vmul.f32 %v1763, %v1794
        %v1800 = vmul.f32 %v1764, %v1794
        %v1801 = vmul.f32 %v1765, %v1794
        %v1802 = vmul.f32 %v1766, %v1794
        %v1803 = vmul.f32 %v1767, %v1794
        %v1804 = vmul.f32 %v1768, %v1794
        %v1805 = vmul.f32 %v1769, %v1794
        %v1806 = vmul.f32 %v1770, %v1794
        %v1807 = vmul.f32 %v1771, %v1794
        %v1808 = vmul.f32 %v1772, %v1794
        %v1809 = vmul.f32 %v1773, %v1794
        %v1810 = vmul.f32 %v1774, %v1794
        %v1811 = vmul.f32 %v1775, %v1794
        %v1812 = vmul.f32 %v1776, %v1794
        %v1813 = vmul.f32 %v1777, %v1794
        %v1814 = vmul.f32 %v1778, %v1794
        %v1815 = vmul.f32 %v1779, %v1794
        %v1816 = vmul.f32 %v1780, %v1794
        %v1817 = vmul.f32 %v1781, %v1794
        %v1818 = vmul.f32 %v1782, %v1794
        %v1819 = vmul.f32 %v1783, %v1794
        %v1820 = vmul.f32 %v1784, %v1794
        %v1821 = vmul.f32 %v1785, %v1794
        %v1822 = vmul.f32 %v1786, %v1794
        %v1823 = vmul.f32 %v1787, %v1794
        %v1824 = vmul.f32 %v1788, %v1794
        %v1825 = vmul.f32 %v1789, %v1794
        %v1826 = vmul.f32 %v1790, %v1794
        %v1827 = vmul.f32 %v1791, %v1794
        %v1828 = vld [vmem:[#allocation11] sm:$0x1]
        %v1830 = vperm.slane %v1828, 0
        %v1832 = vadd.f32 %v1796, %v1830
        %v1833 = vadd.f32 %v1797, %v1830
        %v1834 = vadd.f32 %v1798, %v1830
        %v1835 = vadd.f32 %v1799, %v1830
        %v1836 = vadd.f32 %v1800, %v1830
        %v1837 = vadd.f32 %v1801, %v1830
        %v1838 = vadd.f32 %v1802, %v1830
        %v1839 = vadd.f32 %v1803, %v1830
        %v1840 = vadd.f32 %v1804, %v1830
        %v1841 = vadd.f32 %v1805, %v1830
        %v1842 = vadd.f32 %v1806, %v1830
        %v1843 = vadd.f32 %v1807, %v1830
        %v1844 = vadd.f32 %v1808, %v1830
        %v1845 = vadd.f32 %v1809, %v1830
        %v1846 = vadd.f32 %v1810, %v1830
        %v1847 = vadd.f32 %v1811, %v1830
        %v1848 = vadd.f32 %v1812, %v1830
        %v1849 = vadd.f32 %v1813, %v1830
        %v1850 = vadd.f32 %v1814, %v1830
        %v1851 = vadd.f32 %v1815, %v1830
        %v1852 = vadd.f32 %v1816, %v1830
        %v1853 = vadd.f32 %v1817, %v1830
        %v1854 = vadd.f32 %v1818, %v1830
        %v1855 = vadd.f32 %v1819, %v1830
        %v1856 = vadd.f32 %v1820, %v1830
        %v1857 = vadd.f32 %v1821, %v1830
        %v1858 = vadd.f32 %v1822, %v1830
        %v1859 = vadd.f32 %v1823, %v1830
        %v1860 = vadd.f32 %v1824, %v1830
        %v1861 = vadd.f32 %v1825, %v1830
        %v1862 = vadd.f32 %v1826, %v1830
        %v1863 = vadd.f32 %v1827, %v1830
        %1864 = vst [vmem:[%s264] sm:$0xff] %v1832
        %1865 = vst [vmem:[%s264 + $0x8] sm:$0xff] %v1833
        %1866 = vst [vmem:[%s264 + $0x10] sm:$0xff] %v1834
        %1867 = vst [vmem:[%s264 + $0x18] sm:$0xff] %v1835
        %1868 = vst [vmem:[%s264 + $0x20] sm:$0xff] %v1836
        %1869 = vst [vmem:[%s264 + $0x28] sm:$0xff] %v1837
        %1870 = vst [vmem:[%s264 + $0x30] sm:$0xff] %v1838
        %1871 = vst [vmem:[%s264 + $0x38] sm:$0xff] %v1839
        %1872 = vst [vmem:[%s264 + $0x40] sm:$0xff] %v1840
        %1873 = vst [vmem:[%s264 + $0x48] sm:$0xff] %v1841
        %1874 = vst [vmem:[%s264 + $0x50] sm:$0xff] %v1842
        %1875 = vst [vmem:[%s264 + $0x58] sm:$0xff] %v1843
        %1876 = vst [vmem:[%s264 + $0x60] sm:$0xff] %v1844
        %1877 = vst [vmem:[%s264 + $0x68] sm:$0xff] %v1845
        %1878 = vst [vmem:[%s264 + $0x70] sm:$0xff] %v1846
        %1879 = vst [vmem:[%s264 + $0x78] sm:$0xff] %v1847
        %1880 = vst [vmem:[%s264 + $0x80] sm:$0xff] %v1848
        %1881 = vst [vmem:[%s264 + $0x88] sm:$0xff] %v1849
        %1882 = vst [vmem:[%s264 + $0x90] sm:$0xff] %v1850
        %1883 = vst [vmem:[%s264 + $0x98] sm:$0xff] %v1851
        %1884 = vst [vmem:[%s264 + $0xa0] sm:$0xff] %v1852
        %1885 = vst [vmem:[%s264 + $0xa8] sm:$0xff] %v1853
        %1886 = vst [vmem:[%s264 + $0xb0] sm:$0xff] %v1854
        %1887 = vst [vmem:[%s264 + $0xb8] sm:$0xff] %v1855
        %1888 = vst [vmem:[%s264 + $0xc0] sm:$0xff] %v1856
        %1889 = vst [vmem:[%s264 + $0xc8] sm:$0xff] %v1857
        %1890 = vst [vmem:[%s264 + $0xd0] sm:$0xff] %v1858
        %1891 = vst [vmem:[%s264 + $0xd8] sm:$0xff] %v1859
        %1892 = vst [vmem:[%s264 + $0xe0] sm:$0xff] %v1860
        %1893 = vst [vmem:[%s264 + $0xe8] sm:$0xff] %v1861
        %1894 = vst [vmem:[%s264 + $0xf0] sm:$0xff] %v1862
        %1895 = vst [vmem:[%s264 + $0xf8] sm:$0xff] %v1863
        %s1896 = sand.u32 %s155, 1
        %s1897 = scalar_lea.sflag [#allocation10], %s1896
        %s1898 = sand.u32 %s155, 1
        %s1899 = smul.addr %s1898, 256
        %s1900 = scalar_lea.vmem [#allocation13], %s1899
        // Predicated region
        $region96: #{tpu_custom_call.1} parent=39 // pred_check
          %p1901 = pneg %p165
        $region97: #{tpu_custom_call.1} parent=39 // pred_check_branch
          %1903 = sbr.rel (%p1901) target = $region99
        $region98: #{tpu_custom_call.1} parent=39 // pred_region
          %s1904 = smul.u32 32, %s37
          %1906 = vsyncadd %s1897, 0
          %s1907 = smul.addr %s1904, 8
          %s1908 = scalar_lea.hbm %s8, %s1907
          %s1909 = sshll.u32 %s1900, 4
          %s1910 = int_to_ptr.vmem [resolvable:$true] %s1909
          %s1911 = sshll.u32 %s1908, 4
          %s1912 = int_to_ptr.hbm [resolvable:$true] %s1911
          %1917 = dma.vmem_to_hbm [thread:$0]  %s1910, 4096, %s1912, %s1897, 128, 128, 8
        $region99: #{tpu_custom_call.1} parent=39 // pred_fallthru
          _
      $region40: #{tpu_custom_call.1} parent=5 // pred_fallthru
        _
      %p1918 = scmp.le.s32.totalorder 2, %s32
      // Predicated region
      $region100: #{tpu_custom_call.1} parent=5 // pred_check
        %p1919 = pneg %p1918
      $region101: #{tpu_custom_call.1} parent=5 // pred_check_branch
        %1921 = sbr.rel (%p1919) target = $region103
      $region102: #{tpu_custom_call.1} parent=5 // pred_region
        %s1922 = ssub.s32 %s32, 2
        // Predicated region
        $region104: #{tpu_custom_call.1} parent=102 // pred_check
          %p1923 = pneg %p171
        $region105: #{tpu_custom_call.1} parent=102 // pred_check_branch
          %1925 = sbr.rel (%p1923) target = $region107
        $region106: #{tpu_custom_call.1} parent=102 // pred_region
          %s1926 = sand.u32 %s156, 1
          %s1927 = scalar_lea.sflag [#allocation10], %s1926
          %s1928 = sand.u32 %s156, 1
          %s1929 = smul.addr %s1928, 256
          %s1930 = scalar_lea.vmem [#allocation13], %s1929
          %1932 = dma.done %s1927, 4096
        $region107: #{tpu_custom_call.1} parent=102 // pred_fallthru
          _
      $region103: #{tpu_custom_call.1} parent=5 // pred_fallthru
        _
    $region6: #{tpu_custom_call.1} parent=1 // loop_footer
      %s36 = sadd.s32 1, %s32
    $region7: #{tpu_custom_call.1} parent=1 // loop_footer_branch
      %31 = sbr.rel target = $region3
    $region8: #{tpu_custom_call.1} parent=1 // loop_exit
      _
    %1933 = vsyncpa [#allocation9], 1
    %s1934 = scalar_lea.sflag [#allocation9], 1
    %1935 = vsyncpa %s1934, 1
    %1936 = vsyncpa [#allocation12], 1
    %1937 = vsyncpa [#allocation10], 1
    %s1938 = scalar_lea.sflag [#allocation10], 1
    %1939 = vsyncpa %s1938, 1
  %1940 = vsyncmov [#allocation4]
  %s1941 = vpop.sfrf %1940
  %p1942 = scmp.eq.s32.totalorder %s1941, 0
  %p1943 = pneg %p1942
  %1945 = shalt.err (%p1943)
  %s1946 = scalar_lea.sflag [#allocation4], 1
  %1947 = vsyncmov %s1946
  %s1948 = vpop.sfrf %1947
  %p1949 = scmp.eq.s32.totalorder %s1948, 0
  %p1950 = pneg %p1949
  %1952 = shalt.err (%p1950)
  %s1953 = scalar_lea.sflag [#allocation4], 2
  %1954 = vsyncmov %s1953
  %s1955 = vpop.sfrf %1954
  %p1956 = scmp.eq.s32.totalorder %s1955, 0
  %p1957 = pneg %p1956
  %1959 = shalt.err (%p1957)
  %s1960 = scalar_lea.sflag [#allocation4], 3
  %1961 = vsyncmov %s1960
  %s1962 = vpop.sfrf %1961
  %p1963 = scmp.eq.s32.totalorder %s1962, 0
  %p1964 = pneg %p1963
  %1966 = shalt.err (%p1964)
  %s1967 = scalar_lea.sflag [#allocation4], 4
  %1968 = vsyncmov %s1967
  %s1969 = vpop.sfrf %1968
  %p1970 = scmp.eq.s32.totalorder %s1969, 0
  %p1971 = pneg %p1970
  %1973 = shalt.err (%p1971)
  %s1974 = scalar_lea.sflag [#allocation4], 5
  %1975 = vsyncmov %s1974
  %s1976 = vpop.sfrf %1975
  %p1977 = scmp.eq.s32.totalorder %s1976, 0
  %p1978 = pneg %p1977
  %1980 = shalt.err (%p1978)
  %s1981 = scalar_lea.sflag [#allocation4], 6
  %1982 = vsyncmov %s1981
  %s1983 = vpop.sfrf %1982
  %p1984 = scmp.eq.s32.totalorder %s1983, 0
  %p1985 = pneg %p1984
  %1987 = shalt.err (%p1985)
  %s1988 = scalar_lea.sflag [#allocation4], 7
  %1989 = vsyncmov %s1988
  %s1990 = vpop.sfrf %1989
  %p1991 = scmp.eq.s32.totalorder %s1990, 0
  %p1992 = pneg %p1991
  %1994 = shalt.err (%p1992)

</llo_original>
